<compile_context>
chip_gen: v6e
topology: v6e:2x2x1
jax: 0.10.0
libtpu: 0.0.40
codegen_flags: <defaults>
</compile_context>

<pallas_src>
import functools

import jax
import jax.numpy as jnp
from jax.experimental import pallas as pl
from jax.experimental.pallas import tpu as pltpu

EPS = 1e-5


def _basic_block_kernel(x_ref, w1_ref, s1_ref, b1_ref, w2_ref, s2_ref, b2_ref,
                        *rest, stride, Ho, Wo, Cin, Cout, Cp, has_proj):
    # x_ref : (1, Hs, Ws, s*s*Cin) bf16   padded (phase-split) input
    # w1_ref: (9*Cin, Cout)       bf16   conv1 weights, taps fused on K
    # w2_ref: (9*Cout, Cp)        bf16   conv2 weights, output padded to Cp
    # ws_ref: (Cin, Cp)           bf16   1x1 shortcut weights (projection only)
    # s*/b* : (1, Cout) / (1, Cp) f32    folded BatchNorm scale / bias
    # out   : (1, Ho*Wo, Cp)      f32    lane-dense output block
    # hbuf  : (Ho+2, Wo+2, Cout)  bf16   scratch: zero-padded conv1 activation
    if has_proj:
        ws_ref, ss_ref, bs_ref, out_ref, hbuf = rest
    else:
        out_ref, hbuf = rest

    s = stride

    def tap(kh, kw):
        # tap (kh, kw) of the 3x3 window, at the conv stride: contiguous slice
        # of the phase-split input (no strided loads needed).
        bh, ph = kh // s, kh % s
        bw, pw = kw // s, kw % s
        c0 = (ph * s + pw) * Cin
        t = x_ref[0, bh:bh + Ho, bw:bw + Wo, c0:c0 + Cin]
        return t.reshape(Ho * Wo, Cin)

    # ---- conv1 (3x3, stride s) as one matmul over K = 9*Cin, + BN1 + ReLU ----
    pat1 = jnp.concatenate(
        [tap(kh, kw) for kh in range(3) for kw in range(3)], axis=-1)
    acc1 = jnp.dot(pat1, w1_ref[...], preferred_element_type=jnp.float32)
    h1 = jnp.maximum(acc1 * s1_ref[...] + b1_ref[...], 0.0)

    # ---- zero-padded intermediate for the stride-1 conv2 (border only) ----
    zr = jnp.zeros((1, Wo + 2, Cout), hbuf.dtype)
    zc = jnp.zeros((Ho, 1, Cout), hbuf.dtype)
    hbuf[0:1, :, :] = zr
    hbuf[Ho + 1:Ho + 2, :, :] = zr
    hbuf[1:Ho + 1, 0:1, :] = zc
    hbuf[1:Ho + 1, Wo + 1:Wo + 2, :] = zc
    hbuf[1:Ho + 1, 1:Wo + 1, :] = h1.reshape(Ho, Wo, Cout).astype(hbuf.dtype)

    # ---- conv2 (3x3, stride 1) as one matmul over K = 9*Cout, + BN2 ----
    pat2 = jnp.concatenate(
        [hbuf[kh:kh + Ho, kw:kw + Wo, :].reshape(Ho * Wo, Cout)
         for kh in range(3) for kw in range(3)], axis=-1)
    acc2 = jnp.dot(pat2, w2_ref[...], preferred_element_type=jnp.float32)
    y = acc2 * s2_ref[...] + b2_ref[...]

    # ---- shortcut ----
    xc = tap(1, 1)  # center tap == x sampled at the conv stride
    if has_proj:
        idy = jnp.dot(xc, ws_ref[...], preferred_element_type=jnp.float32)
        idy = idy * ss_ref[...] + bs_ref[...]
    else:
        idy = xc.astype(jnp.float32)          # identity: Cin == Cout
        if Cp > Cout:
            idy = jnp.concatenate(
                [idy, jnp.zeros((Ho * Wo, Cp - Cout), jnp.float32)], axis=-1)

    out_ref[0] = jnp.maximum(y + idy, 0.0).astype(out_ref.dtype)


def _fold_bn(gamma, beta, mean, var):
    scale = gamma / jnp.sqrt(var + EPS)
    bias = beta - mean * scale
    return scale.reshape(1, -1), bias.reshape(1, -1)


def basic_block_forward(x, params, stride):
    """x: (N, Cin, H, W) float32 NCHW (like PyTorch). Returns (N, Cout, Ho, Wo)."""
    N, Cin, H, W = x.shape
    Cout = params["w1"].shape[0]
    s = int(stride)
    Ho = (H + 2 - 3) // s + 1
    Wo = (W + 2 - 3) // s + 1
    has_proj = params.get("ws") is not None
    if not has_proj:
        assert s == 1 and Cin == Cout, (
            "identity shortcut requires stride == 1 and Cin == Cout")
    Cp = ((Cout + 127) // 128) * 128          # lane-dense padded output channels

    # ---- layout glue (plain XLA): NCHW->NHWC, zero-pad, phase-split if s>1 ----
    Hs = Ho + 2 // s
    Ws = Wo + 2 // s
    x_nhwc = jnp.transpose(x, (0, 2, 3, 1))
    xpad = jnp.pad(x_nhwc, ((0, 0), (1, s * Hs - H - 1), (1, s * Ws - W - 1), (0, 0)))
    if s == 1:
        xs = xpad                                              # (N, Hs, Ws, Cin)
    else:  # space-to-depth: same bytes as the input, no 9x im2col expansion
        xs = (xpad.reshape(N, Hs, s, Ws, s, Cin)
                  .transpose(0, 1, 3, 2, 4, 5)
                  .reshape(N, Hs, Ws, s * s * Cin))
    xs = xs.astype(jnp.bfloat16)
    Cs = s * s * Cin

    # ---- weights / folded BN params (bf16 for the MXU, f32 for affine) ----
    w1 = jnp.transpose(params["w1"], (2, 3, 1, 0)).reshape(9 * Cin, Cout)
    w1 = w1.astype(jnp.bfloat16)
    w2 = jnp.transpose(params["w2"], (2, 3, 1, 0)).reshape(9 * Cout, Cout)
    w2 = jnp.pad(w2, ((0, 0), (0, Cp - Cout))).astype(jnp.bfloat16)
    s1, b1 = _fold_bn(*params["bn1"])
    s2, b2 = _fold_bn(*params["bn2"])
    s2 = jnp.pad(s2, ((0, 0), (0, Cp - Cout)))
    b2 = jnp.pad(b2, ((0, 0), (0, Cp - Cout)))

    args = [xs, w1, s1, b1, w2, s2, b2]
    in_specs = [
        pl.BlockSpec((1, Hs, Ws, Cs), lambda n: (n, 0, 0, 0)),
        pl.BlockSpec((9 * Cin, Cout), lambda n: (0, 0)),
        pl.BlockSpec((1, Cout), lambda n: (0, 0)),
        pl.BlockSpec((1, Cout), lambda n: (0, 0)),
        pl.BlockSpec((9 * Cout, Cp), lambda n: (0, 0)),
        pl.BlockSpec((1, Cp), lambda n: (0, 0)),
        pl.BlockSpec((1, Cp), lambda n: (0, 0)),
    ]
    if has_proj:
        ws = jnp.transpose(params["ws"], (2, 3, 1, 0)).reshape(Cin, Cout)
        ws = jnp.pad(ws, ((0, 0), (0, Cp - Cout))).astype(jnp.bfloat16)
        ss, bs = _fold_bn(*params["bns"])
        ss = jnp.pad(ss, ((0, 0), (0, Cp - Cout)))
        bs = jnp.pad(bs, ((0, 0), (0, Cp - Cout)))
        args += [ws, ss, bs]
        in_specs += [
            pl.BlockSpec((Cin, Cp), lambda n: (0, 0)),
            pl.BlockSpec((1, Cp), lambda n: (0, 0)),
            pl.BlockSpec((1, Cp), lambda n: (0, 0)),
        ]

    kernel = functools.partial(
        _basic_block_kernel, stride=s, Ho=Ho, Wo=Wo, Cin=Cin, Cout=Cout,
        Cp=Cp, has_proj=has_proj)

    out = pl.pallas_call(
        kernel,
        out_shape=jax.ShapeDtypeStruct((N, Ho * Wo, Cp), jnp.float32),
        grid=(N,),
        in_specs=in_specs,
        out_specs=pl.BlockSpec((1, Ho * Wo, Cp), lambda n: (n, 0, 0)),
        scratch_shapes=[pltpu.VMEM((Ho + 2, Wo + 2, Cout), jnp.bfloat16)],
        compiler_params=pltpu.CompilerParams(
            dimension_semantics=("parallel",)),
    )(*args)

    out = out.reshape(N, Ho, Wo, Cp)[:, :, :, :Cout]
    return jnp.transpose(out, (0, 3, 1, 2))                    # back to NCHW


# ------------------------- pure-JAX f32 reference -------------------------
def reference_basic_block(x, params, stride):
    def conv(x, w, s, pad):
        return jax.lax.conv_general_dilated(
            x, w, window_strides=(s, s), padding=pad,
            dimension_numbers=("NCHW", "OIHW", "NCHW"))

    def bn(x, gamma, beta, mean, var):
        inv = gamma / jnp.sqrt(var + EPS)
        return (x * inv[None, :, None, None]
                + (beta - mean * inv)[None, :, None, None])

    if params["ws"] is not None:
        idy = conv(x, params["ws"], stride, ((0, 0), (0, 0)))
        idy = bn(idy, *params["bns"])
    else:
        idy = x
    out = conv(x, params["w1"], stride, ((1, 1), (1, 1)))
    out = jnp.maximum(bn(out, *params["bn1"]), 0.0)
    out = conv(out, params["w2"], 1, ((1, 1), (1, 1)))
    out = bn(out, *params["bn2"])
    return jnp.maximum(out + idy, 0.0)


def make_params(key, in_channels, out_channels, stride):
    ks = jax.random.split(key, 6)

    def bn_params(k):
        k1, k2, k3, k4 = jax.random.split(k, 4)
        gamma = jax.random.uniform(k1, (out_channels,), jnp.float32, 0.5, 1.5)
        beta = 0.1 * jax.random.normal(k2, (out_channels,), jnp.float32)
        mean = 0.1 * jax.random.normal(k3, (out_channels,), jnp.float32)
        var = jax.random.uniform(k4, (out_channels,), jnp.float32, 0.5, 1.5)
        return (gamma, beta, mean, var)

    params = {
        "w1": 0.1 * jax.random.normal(ks[0], (out_channels, in_channels, 3, 3),
                                      jnp.float32),
        "bn1": bn_params(ks[1]),
        "w2": 0.1 * jax.random.normal(ks[2], (out_channels, out_channels, 3, 3),
                                      jnp.float32),
        "bn2": bn_params(ks[3]),
        "ws": None,
        "bns": None,
    }
    if stride != 1 or in_channels != out_channels:
        params["ws"] = 0.1 * jax.random.normal(
            ks[4], (out_channels, in_channels, 1, 1), jnp.float32)
        params["bns"] = bn_params(ks[5])
    return params


if __name__ == "__main__":
    key = jax.random.PRNGKey(0)
    N, H, W = 2, 16, 16
    configs = [
        (8, 16, 2),    # projection shortcut (stride 2, Cin != Cout)
        (16, 16, 1),   # identity shortcut
    ]
    for i, (cin, cout, stride) in enumerate(configs):
        kx, kp, key = jax.random.split(key, 3)
        x = jax.random.normal(kx, (N, cin, H, W), jnp.float32)
        params = make_params(kp, cin, cout, stride)

        out = jax.block_until_ready(basic_block_forward(x, params, stride))
        ref = reference_basic_block(x, params, stride)

        assert out.shape == ref.shape, (out.shape, ref.shape)
        # bf16 MXU inputs (f32 accumulation) -> compare with a relative-L2 bound.
        rel = float(jnp.linalg.norm(out - ref) / (jnp.linalg.norm(ref) + 1e-8))
        assert rel < 2e-2, f"config {i}: relative L2 error too large: {rel}"

    print("KERNEL_OK")
</pallas_src>

<mosaic_0001>
module attributes {stable_mosaic.version = 11 : i64} {
  func.func @_basic_block_kernel(%arg0: i32, %arg1: memref<1x9x9x32xbf16, #tpu.memory_space<vmem>>, %arg2: memref<72x16xbf16, #tpu.memory_space<vmem>>, %arg3: memref<1x16xf32, #tpu.memory_space<vmem>>, %arg4: memref<1x16xf32, #tpu.memory_space<vmem>>, %arg5: memref<144x128xbf16, #tpu.memory_space<vmem>>, %arg6: memref<1x128xf32, #tpu.memory_space<vmem>>, %arg7: memref<1x128xf32, #tpu.memory_space<vmem>>, %arg8: memref<8x128xbf16, #tpu.memory_space<vmem>>, %arg9: memref<1x128xf32, #tpu.memory_space<vmem>>, %arg10: memref<1x128xf32, #tpu.memory_space<vmem>>, %arg11: memref<1x64x128xf32, #tpu.memory_space<vmem>>, %arg12: memref<10x10x16xbf16, #tpu.memory_space<vmem>>) attributes {dimension_semantics = [#tpu.dimension_semantics<parallel>], iteration_bounds = array<i64: 2>, scalar_prefetch = 0 : i64, scratch_operands = 1 : i64, tpu.core_type = #tpu.core_type<tc>, window_params = [{transform_indices = @transform_0, window_bounds = array<i64: 1, 9, 9, 32>}, {pipeline_mode = #tpu.pipeline_mode<synchronous>, transform_indices = @transform_1, window_bounds = array<i64: 72, 16>}, {pipeline_mode = #tpu.pipeline_mode<synchronous>, transform_indices = @transform_2, window_bounds = array<i64: 1, 16>}, {pipeline_mode = #tpu.pipeline_mode<synchronous>, transform_indices = @transform_3, window_bounds = array<i64: 1, 16>}, {pipeline_mode = #tpu.pipeline_mode<synchronous>, transform_indices = @transform_4, window_bounds = array<i64: 144, 128>}, {pipeline_mode = #tpu.pipeline_mode<synchronous>, transform_indices = @transform_5, window_bounds = array<i64: 1, 128>}, {pipeline_mode = #tpu.pipeline_mode<synchronous>, transform_indices = @transform_6, window_bounds = array<i64: 1, 128>}, {pipeline_mode = #tpu.pipeline_mode<synchronous>, transform_indices = @transform_7, window_bounds = array<i64: 8, 128>}, {pipeline_mode = #tpu.pipeline_mode<synchronous>, transform_indices = @transform_8, window_bounds = array<i64: 1, 128>}, {pipeline_mode = #tpu.pipeline_mode<synchronous>, transform_indices = @transform_9, window_bounds = array<i64: 1, 128>}, {transform_indices = @transform_10, window_bounds = array<i64: 1, 64, 128>}]} {
    %c0 = arith.constant 0 : index
    %c0_0 = arith.constant 0 : index
    %c0_1 = arith.constant 0 : index
    %c0_2 = arith.constant 0 : index
    %0 = vector.load %arg1[%c0, %c0_0, %c0_1, %c0_2] : memref<1x9x9x32xbf16, #tpu.memory_space<vmem>>, vector<1x8x8x8xbf16>
    %1 = vector.shape_cast %0 : vector<1x8x8x8xbf16> to vector<8x8x8xbf16>
    %2 = vector.shape_cast %1 : vector<8x8x8xbf16> to vector<64x8xbf16>
    %c0_3 = arith.constant 0 : index
    %c0_4 = arith.constant 0 : index
    %c0_5 = arith.constant 0 : index
    %c8 = arith.constant 8 : index
    %3 = vector.load %arg1[%c0_3, %c0_4, %c0_5, %c8] : memref<1x9x9x32xbf16, #tpu.memory_space<vmem>>, vector<1x8x8x8xbf16>
    %4 = vector.shape_cast %3 : vector<1x8x8x8xbf16> to vector<8x8x8xbf16>
    %5 = vector.shape_cast %4 : vector<8x8x8xbf16> to vector<64x8xbf16>
    %c0_6 = arith.constant 0 : index
    %c0_7 = arith.constant 0 : index
    %c1 = arith.constant 1 : index
    %c0_8 = arith.constant 0 : index
    %6 = vector.load %arg1[%c0_6, %c0_7, %c1, %c0_8] : memref<1x9x9x32xbf16, #tpu.memory_space<vmem>>, vector<1x8x8x8xbf16>
    %7 = vector.shape_cast %6 : vector<1x8x8x8xbf16> to vector<8x8x8xbf16>
    %8 = vector.shape_cast %7 : vector<8x8x8xbf16> to vector<64x8xbf16>
    %c0_9 = arith.constant 0 : index
    %c0_10 = arith.constant 0 : index
    %c0_11 = arith.constant 0 : index
    %c16 = arith.constant 16 : index
    %9 = vector.load %arg1[%c0_9, %c0_10, %c0_11, %c16] : memref<1x9x9x32xbf16, #tpu.memory_space<vmem>>, vector<1x8x8x8xbf16>
    %10 = vector.shape_cast %9 : vector<1x8x8x8xbf16> to vector<8x8x8xbf16>
    %11 = vector.shape_cast %10 : vector<8x8x8xbf16> to vector<64x8xbf16>
    %c0_12 = arith.constant 0 : index
    %c0_13 = arith.constant 0 : index
    %c0_14 = arith.constant 0 : index
    %c24 = arith.constant 24 : index
    %12 = vector.load %arg1[%c0_12, %c0_13, %c0_14, %c24] : memref<1x9x9x32xbf16, #tpu.memory_space<vmem>>, vector<1x8x8x8xbf16>
    %13 = vector.shape_cast %12 : vector<1x8x8x8xbf16> to vector<8x8x8xbf16>
    %14 = vector.shape_cast %13 : vector<8x8x8xbf16> to vector<64x8xbf16>
    %c0_15 = arith.constant 0 : index
    %c0_16 = arith.constant 0 : index
    %c1_17 = arith.constant 1 : index
    %c16_18 = arith.constant 16 : index
    %15 = vector.load %arg1[%c0_15, %c0_16, %c1_17, %c16_18] : memref<1x9x9x32xbf16, #tpu.memory_space<vmem>>, vector<1x8x8x8xbf16>
    %16 = vector.shape_cast %15 : vector<1x8x8x8xbf16> to vector<8x8x8xbf16>
    %17 = vector.shape_cast %16 : vector<8x8x8xbf16> to vector<64x8xbf16>
    %c0_19 = arith.constant 0 : index
    %c1_20 = arith.constant 1 : index
    %c0_21 = arith.constant 0 : index
    %c0_22 = arith.constant 0 : index
    %18 = vector.load %arg1[%c0_19, %c1_20, %c0_21, %c0_22] : memref<1x9x9x32xbf16, #tpu.memory_space<vmem>>, vector<1x8x8x8xbf16>
    %19 = vector.shape_cast %18 : vector<1x8x8x8xbf16> to vector<8x8x8xbf16>
    %20 = vector.shape_cast %19 : vector<8x8x8xbf16> to vector<64x8xbf16>
    %c0_23 = arith.constant 0 : index
    %c1_24 = arith.constant 1 : index
    %c0_25 = arith.constant 0 : index
    %c8_26 = arith.constant 8 : index
    %21 = vector.load %arg1[%c0_23, %c1_24, %c0_25, %c8_26] : memref<1x9x9x32xbf16, #tpu.memory_space<vmem>>, vector<1x8x8x8xbf16>
    %22 = vector.shape_cast %21 : vector<1x8x8x8xbf16> to vector<8x8x8xbf16>
    %23 = vector.shape_cast %22 : vector<8x8x8xbf16> to vector<64x8xbf16>
    %c0_27 = arith.constant 0 : index
    %c1_28 = arith.constant 1 : index
    %c1_29 = arith.constant 1 : index
    %c0_30 = arith.constant 0 : index
    %24 = vector.load %arg1[%c0_27, %c1_28, %c1_29, %c0_30] : memref<1x9x9x32xbf16, #tpu.memory_space<vmem>>, vector<1x8x8x8xbf16>
    %25 = vector.shape_cast %24 : vector<1x8x8x8xbf16> to vector<8x8x8xbf16>
    %26 = vector.shape_cast %25 : vector<8x8x8xbf16> to vector<64x8xbf16>
    %27 = tpu.concatenate %2, %5, %8, %11, %14, %17, %20, %23, %26 in 1 : vector<64x8xbf16>, vector<64x8xbf16>, vector<64x8xbf16>, vector<64x8xbf16>, vector<64x8xbf16>, vector<64x8xbf16>, vector<64x8xbf16>, vector<64x8xbf16>, vector<64x8xbf16> -> vector<64x72xbf16>
    %c0_31 = arith.constant 0 : index
    %c0_32 = arith.constant 0 : index
    %28 = vector.load %arg2[%c0_31, %c0_32] : memref<72x16xbf16, #tpu.memory_space<vmem>>, vector<72x16xbf16>
    %cst = arith.constant dense<0.000000e+00> : vector<64x16xf32>
    %29 = tpu.matmul %27, %28, %cst {dimension_numbers = #tpu.dot_dimension_numbers<[1], [0], [0], [1], [0, 0, 1, 1], [], []>} : vector<64x72xbf16>, vector<72x16xbf16>, vector<64x16xf32> -> vector<64x16xf32>
    %c0_33 = arith.constant 0 : index
    %c0_34 = arith.constant 0 : index
    %30 = vector.load %arg3[%c0_33, %c0_34] : memref<1x16xf32, #tpu.memory_space<vmem>>, vector<1x16xf32>
    %31 = vector.broadcast %30 : vector<1x16xf32> to vector<64x16xf32>
    %32 = arith.mulf %29, %31 : vector<64x16xf32>
    %c0_35 = arith.constant 0 : index
    %c0_36 = arith.constant 0 : index
    %33 = vector.load %arg4[%c0_35, %c0_36] : memref<1x16xf32, #tpu.memory_space<vmem>>, vector<1x16xf32>
    %34 = vector.broadcast %33 : vector<1x16xf32> to vector<64x16xf32>
    %35 = arith.addf %32, %34 : vector<64x16xf32>
    %cst_37 = arith.constant 0.000000e+00 : f32
    %36 = vector.broadcast %cst_37 : f32 to vector<64x16xf32>
    %37 = arith.maximumf %35, %36 : vector<64x16xf32>
    %cst_38 = arith.constant 0.000000e+00 : bf16
    %38 = vector.broadcast %cst_38 : bf16 to vector<1x10x16xbf16>
    %cst_39 = arith.constant 0.000000e+00 : bf16
    %39 = vector.broadcast %cst_39 : bf16 to vector<8x1x16xbf16>
    %c0_40 = arith.constant 0 : index
    %c0_41 = arith.constant 0 : index
    %c0_42 = arith.constant 0 : index
    %40 = vector.load %arg12[%c0_40, %c0_41, %c0_42] : memref<10x10x16xbf16, #tpu.memory_space<vmem>>, vector<1x10x16xbf16>
    tpu.vector_store %arg12[%c0_40, %c0_41, %c0_42], %38 {strides = array<i32>} : memref<10x10x16xbf16, #tpu.memory_space<vmem>>, vector<1x10x16xbf16>,
    %c9 = arith.constant 9 : index
    %c0_43 = arith.constant 0 : index
    %c0_44 = arith.constant 0 : index
    %41 = vector.load %arg12[%c9, %c0_43, %c0_44] : memref<10x10x16xbf16, #tpu.memory_space<vmem>>, vector<1x10x16xbf16>
    tpu.vector_store %arg12[%c9, %c0_43, %c0_44], %38 {strides = array<i32>} : memref<10x10x16xbf16, #tpu.memory_space<vmem>>, vector<1x10x16xbf16>,
    %c1_45 = arith.constant 1 : index
    %c0_46 = arith.constant 0 : index
    %c0_47 = arith.constant 0 : index
    %42 = vector.load %arg12[%c1_45, %c0_46, %c0_47] : memref<10x10x16xbf16, #tpu.memory_space<vmem>>, vector<8x1x16xbf16>
    tpu.vector_store %arg12[%c1_45, %c0_46, %c0_47], %39 {strides = array<i32>} : memref<10x10x16xbf16, #tpu.memory_space<vmem>>, vector<8x1x16xbf16>,
    %c1_48 = arith.constant 1 : index
    %c9_49 = arith.constant 9 : index
    %c0_50 = arith.constant 0 : index
    %43 = vector.load %arg12[%c1_48, %c9_49, %c0_50] : memref<10x10x16xbf16, #tpu.memory_space<vmem>>, vector<8x1x16xbf16>
    tpu.vector_store %arg12[%c1_48, %c9_49, %c0_50], %39 {strides = array<i32>} : memref<10x10x16xbf16, #tpu.memory_space<vmem>>, vector<8x1x16xbf16>,
    %44 = vector.shape_cast %37 : vector<64x16xf32> to vector<8x8x16xf32>
    %45 = arith.truncf %44 : vector<8x8x16xf32> to vector<8x8x16xbf16>
    %c1_51 = arith.constant 1 : index
    %c1_52 = arith.constant 1 : index
    %c0_53 = arith.constant 0 : index
    %46 = vector.load %arg12[%c1_51, %c1_52, %c0_53] : memref<10x10x16xbf16, #tpu.memory_space<vmem>>, vector<8x8x16xbf16>
    tpu.vector_store %arg12[%c1_51, %c1_52, %c0_53], %45 {strides = array<i32>} : memref<10x10x16xbf16, #tpu.memory_space<vmem>>, vector<8x8x16xbf16>,
    %c0_54 = arith.constant 0 : index
    %c0_55 = arith.constant 0 : index
    %c0_56 = arith.constant 0 : index
    %47 = vector.load %arg12[%c0_54, %c0_55, %c0_56] : memref<10x10x16xbf16, #tpu.memory_space<vmem>>, vector<8x8x16xbf16>
    %48 = vector.shape_cast %47 : vector<8x8x16xbf16> to vector<64x16xbf16>
    %c0_57 = arith.constant 0 : index
    %c1_58 = arith.constant 1 : index
    %c0_59 = arith.constant 0 : index
    %49 = vector.load %arg12[%c0_57, %c1_58, %c0_59] : memref<10x10x16xbf16, #tpu.memory_space<vmem>>, vector<8x8x16xbf16>
    %50 = vector.shape_cast %49 : vector<8x8x16xbf16> to vector<64x16xbf16>
    %c0_60 = arith.constant 0 : index
    %c2 = arith.constant 2 : index
    %c0_61 = arith.constant 0 : index
    %51 = vector.load %arg12[%c0_60, %c2, %c0_61] : memref<10x10x16xbf16, #tpu.memory_space<vmem>>, vector<8x8x16xbf16>
    %52 = vector.shape_cast %51 : vector<8x8x16xbf16> to vector<64x16xbf16>
    %c1_62 = arith.constant 1 : index
    %c0_63 = arith.constant 0 : index
    %c0_64 = arith.constant 0 : index
    %53 = vector.load %arg12[%c1_62, %c0_63, %c0_64] : memref<10x10x16xbf16, #tpu.memory_space<vmem>>, vector<8x8x16xbf16>
    %54 = vector.shape_cast %53 : vector<8x8x16xbf16> to vector<64x16xbf16>
    %c1_65 = arith.constant 1 : index
    %c1_66 = arith.constant 1 : index
    %c0_67 = arith.constant 0 : index
    %55 = vector.load %arg12[%c1_65, %c1_66, %c0_67] : memref<10x10x16xbf16, #tpu.memory_space<vmem>>, vector<8x8x16xbf16>
    %56 = vector.shape_cast %55 : vector<8x8x16xbf16> to vector<64x16xbf16>
    %c1_68 = arith.constant 1 : index
    %c2_69 = arith.constant 2 : index
    %c0_70 = arith.constant 0 : index
    %57 = vector.load %arg12[%c1_68, %c2_69, %c0_70] : memref<10x10x16xbf16, #tpu.memory_space<vmem>>, vector<8x8x16xbf16>
    %58 = vector.shape_cast %57 : vector<8x8x16xbf16> to vector<64x16xbf16>
    %c2_71 = arith.constant 2 : index
    %c0_72 = arith.constant 0 : index
    %c0_73 = arith.constant 0 : index
    %59 = vector.load %arg12[%c2_71, %c0_72, %c0_73] : memref<10x10x16xbf16, #tpu.memory_space<vmem>>, vector<8x8x16xbf16>
    %60 = vector.shape_cast %59 : vector<8x8x16xbf16> to vector<64x16xbf16>
    %c2_74 = arith.constant 2 : index
    %c1_75 = arith.constant 1 : index
    %c0_76 = arith.constant 0 : index
    %61 = vector.load %arg12[%c2_74, %c1_75, %c0_76] : memref<10x10x16xbf16, #tpu.memory_space<vmem>>, vector<8x8x16xbf16>
    %62 = vector.shape_cast %61 : vector<8x8x16xbf16> to vector<64x16xbf16>
    %c2_77 = arith.constant 2 : index
    %c2_78 = arith.constant 2 : index
    %c0_79 = arith.constant 0 : index
    %63 = vector.load %arg12[%c2_77, %c2_78, %c0_79] : memref<10x10x16xbf16, #tpu.memory_space<vmem>>, vector<8x8x16xbf16>
    %64 = vector.shape_cast %63 : vector<8x8x16xbf16> to vector<64x16xbf16>
    %65 = tpu.concatenate %48, %50, %52, %54, %56, %58, %60, %62, %64 in 1 : vector<64x16xbf16>, vector<64x16xbf16>, vector<64x16xbf16>, vector<64x16xbf16>, vector<64x16xbf16>, vector<64x16xbf16>, vector<64x16xbf16>, vector<64x16xbf16>, vector<64x16xbf16> -> vector<64x144xbf16>
    %c0_80 = arith.constant 0 : index
    %c0_81 = arith.constant 0 : index
    %66 = vector.load %arg5[%c0_80, %c0_81] : memref<144x128xbf16, #tpu.memory_space<vmem>>, vector<144x128xbf16>
    %cst_82 = arith.constant dense<0.000000e+00> : vector<64x128xf32>
    %67 = tpu.matmul %65, %66, %cst_82 {dimension_numbers = #tpu.dot_dimension_numbers<[1], [0], [0], [1], [0, 0, 1, 1], [], []>} : vector<64x144xbf16>, vector<144x128xbf16>, vector<64x128xf32> -> vector<64x128xf32>
    %c0_83 = arith.constant 0 : index
    %c0_84 = arith.constant 0 : index
    %68 = vector.load %arg6[%c0_83, %c0_84] : memref<1x128xf32, #tpu.memory_space<vmem>>, vector<1x128xf32>
    %69 = vector.broadcast %68 : vector<1x128xf32> to vector<64x128xf32>
    %70 = arith.mulf %67, %69 : vector<64x128xf32>
    %c0_85 = arith.constant 0 : index
    %c0_86 = arith.constant 0 : index
    %71 = vector.load %arg7[%c0_85, %c0_86] : memref<1x128xf32, #tpu.memory_space<vmem>>, vector<1x128xf32>
    %72 = vector.broadcast %71 : vector<1x128xf32> to vector<64x128xf32>
    %73 = arith.addf %70, %72 : vector<64x128xf32>
    %c0_87 = arith.constant 0 : index
    %c0_88 = arith.constant 0 : index
    %c0_89 = arith.constant 0 : index
    %c24_90 = arith.constant 24 : index
    %74 = vector.load %arg1[%c0_87, %c0_88, %c0_89, %c24_90] : memref<1x9x9x32xbf16, #tpu.memory_space<vmem>>, vector<1x8x8x8xbf16>
    %75 = vector.shape_cast %74 : vector<1x8x8x8xbf16> to vector<8x8x8xbf16>
    %76 = vector.shape_cast %75 : vector<8x8x8xbf16> to vector<64x8xbf16>
    %c0_91 = arith.constant 0 : index
    %c0_92 = arith.constant 0 : index
    %77 = vector.load %arg8[%c0_91, %c0_92] : memref<8x128xbf16, #tpu.memory_space<vmem>>, vector<8x128xbf16>
    %cst_93 = arith.constant dense<0.000000e+00> : vector<64x128xf32>
    %78 = tpu.matmul %76, %77, %cst_93 {dimension_numbers = #tpu.dot_dimension_numbers<[1], [0], [0], [1], [0, 0, 1, 1], [], []>} : vector<64x8xbf16>, vector<8x128xbf16>, vector<64x128xf32> -> vector<64x128xf32>
    %c0_94 = arith.constant 0 : index
    %c0_95 = arith.constant 0 : index
    %79 = vector.load %arg9[%c0_94, %c0_95] : memref<1x128xf32, #tpu.memory_space<vmem>>, vector<1x128xf32>
    %80 = vector.broadcast %79 : vector<1x128xf32> to vector<64x128xf32>
    %81 = arith.mulf %78, %80 : vector<64x128xf32>
    %c0_96 = arith.constant 0 : index
    %c0_97 = arith.constant 0 : index
    %82 = vector.load %arg10[%c0_96, %c0_97] : memref<1x128xf32, #tpu.memory_space<vmem>>, vector<1x128xf32>
    %83 = vector.broadcast %82 : vector<1x128xf32> to vector<64x128xf32>
    %84 = arith.addf %81, %83 : vector<64x128xf32>
    %85 = arith.addf %73, %84 : vector<64x128xf32>
    %cst_98 = arith.constant 0.000000e+00 : f32
    %86 = vector.broadcast %cst_98 : f32 to vector<64x128xf32>
    %87 = arith.maximumf %85, %86 : vector<64x128xf32>
    %c0_99 = arith.constant 0 : index
    %c0_100 = arith.constant 0 : index
    %c0_101 = arith.constant 0 : index
    %88 = vector.load %arg11[%c0_99, %c0_100, %c0_101] : memref<1x64x128xf32, #tpu.memory_space<vmem>>, vector<1x64x128xf32>
    %89 = vector.shape_cast %88 : vector<1x64x128xf32> to vector<64x128xf32>
    %90 = vector.shape_cast %87 : vector<64x128xf32> to vector<1x64x128xf32>
    tpu.vector_store %arg11[%c0_99, %c0_100, %c0_101], %90 {strides = array<i32>} : memref<1x64x128xf32, #tpu.memory_space<vmem>>, vector<1x64x128xf32>,
    return
  }
  func.func @transform_0(%arg0: i32) -> (i32, i32, i32, i32) {
    %c0_i32 = arith.constant 0 : i32
    %c0_i32_0 = arith.constant 0 : i32
    %c0_i32_1 = arith.constant 0 : i32
    %c0_i32_2 = arith.constant 0 : i32
    return %arg0, %c0_i32, %c0_i32_0, %c0_i32_1 : i32, i32, i32, i32
  }
  func.func @transform_1(%arg0: i32) -> (i32, i32) {
    %c0_i32 = arith.constant 0 : i32
    %c0_i32_0 = arith.constant 0 : i32
    %c0_i32_1 = arith.constant 0 : i32
    return %c0_i32, %c0_i32_0 : i32, i32
  }
  func.func @transform_2(%arg0: i32) -> (i32, i32) {
    %c0_i32 = arith.constant 0 : i32
    %c0_i32_0 = arith.constant 0 : i32
    %c0_i32_1 = arith.constant 0 : i32
    return %c0_i32, %c0_i32_0 : i32, i32
  }
  func.func @transform_3(%arg0: i32) -> (i32, i32) {
    %c0_i32 = arith.constant 0 : i32
    %c0_i32_0 = arith.constant 0 : i32
    %c0_i32_1 = arith.constant 0 : i32
    return %c0_i32, %c0_i32_0 : i32, i32
  }
  func.func @transform_4(%arg0: i32) -> (i32, i32) {
    %c0_i32 = arith.constant 0 : i32
    %c0_i32_0 = arith.constant 0 : i32
    %c0_i32_1 = arith.constant 0 : i32
    return %c0_i32, %c0_i32_0 : i32, i32
  }
  func.func @transform_5(%arg0: i32) -> (i32, i32) {
    %c0_i32 = arith.constant 0 : i32
    %c0_i32_0 = arith.constant 0 : i32
    %c0_i32_1 = arith.constant 0 : i32
    return %c0_i32, %c0_i32_0 : i32, i32
  }
  func.func @transform_6(%arg0: i32) -> (i32, i32) {
    %c0_i32 = arith.constant 0 : i32
    %c0_i32_0 = arith.constant 0 : i32
    %c0_i32_1 = arith.constant 0 : i32
    return %c0_i32, %c0_i32_0 : i32, i32
  }
  func.func @transform_7(%arg0: i32) -> (i32, i32) {
    %c0_i32 = arith.constant 0 : i32
    %c0_i32_0 = arith.constant 0 : i32
    %c0_i32_1 = arith.constant 0 : i32
    return %c0_i32, %c0_i32_0 : i32, i32
  }
  func.func @transform_8(%arg0: i32) -> (i32, i32) {
    %c0_i32 = arith.constant 0 : i32
    %c0_i32_0 = arith.constant 0 : i32
    %c0_i32_1 = arith.constant 0 : i32
    return %c0_i32, %c0_i32_0 : i32, i32
  }
  func.func @transform_9(%arg0: i32) -> (i32, i32) {
    %c0_i32 = arith.constant 0 : i32
    %c0_i32_0 = arith.constant 0 : i32
    %c0_i32_1 = arith.constant 0 : i32
    return %c0_i32, %c0_i32_0 : i32, i32
  }
  func.func @transform_10(%arg0: i32) -> (i32, i32, i32) {
    %c0_i32 = arith.constant 0 : i32
    %c0_i32_0 = arith.constant 0 : i32
    %c0_i32_1 = arith.constant 0 : i32
    return %arg0, %c0_i32, %c0_i32_0 : i32, i32, i32
  }
}

</mosaic_0001>

<llo_original>
// kernel: tpu_custom_call.1
$region0: #{tpu_custom_call.1}
  #allocation0 [shape = 'u32[]', space=smem, size = 0x4, offset = 0x4, fixed_abs, tag = 'smem constant byte address 0x4 - core index']
  #allocation1 [shape = 'u32[144,128]{1,0:T(1,128)}', space=vmem, size = 0x12000, scoped, tag = 'internal scratch']
  #allocation2 [shape = 'bf16[10,10,16]{2,1,0:T(8,128)(2,1)}', space=vmem, size = 0xa000, scoped, tag = 'scratch operand']
  %s0 = inlined_call_operand.vmem [shape: bf16[2,9,9,32], index: 0, kind: input, shape index: {}]
  %s1 = inlined_call_operand.vmem [shape: bf16[72,16], index: 1, kind: input, shape index: {}]
  %s2 = inlined_call_operand.vmem [shape: f32[1,16], index: 2, kind: input, shape index: {}]
  %s3 = inlined_call_operand.vmem [shape: f32[1,16], index: 3, kind: input, shape index: {}]
  %s4 = inlined_call_operand.vmem [shape: bf16[144,128], index: 4, kind: input, shape index: {}]
  %s5 = inlined_call_operand.vmem [shape: f32[1,128], index: 5, kind: input, shape index: {}]
  %s6 = inlined_call_operand.vmem [shape: f32[1,128], index: 6, kind: input, shape index: {}]
  %s7 = inlined_call_operand.vmem [shape: bf16[8,128], index: 7, kind: input, shape index: {}]
  %s8 = inlined_call_operand.vmem [shape: f32[1,128], index: 8, kind: input, shape index: {}]
  %s9 = inlined_call_operand.vmem [shape: f32[1,128], index: 9, kind: input, shape index: {}]
  %s10 = inlined_call_operand.hbm [shape: f32[2,64,128], index: 10, kind: output, shape index: {}]
  %s11 = sld [smem:[#allocation0]]
  $region73: #{tpu_custom_call.1} parent=0
    _
  %s13 = ssub.s32 1, %s11
  %s14 = scalar_select 0, %s13, %s11
  $region1: #{tpu_custom_call.1} parent=0
    #allocation3 [shape = 'u8[65536]{0}', space=vmem, size = 0x10000, scoped, tag = 'output window, operand 0']
    #allocation4 [shape = 's32[2]{0}', space=sflag, size = 0x8, scoped, tag = 'scoped memory for tpu_custom_call.1']
    %15 = vsyncpa [#allocation4], 0
    %s16 = scalar_lea.sflag [#allocation4], 1
    %17 = vsyncpa %s16, 0
    loop: start=0, step=1, limit=4
    $region2: #{tpu_custom_call.1} parent=1 // loop_pre_header
      _
    $region3: #{tpu_custom_call.1} parent=1 // loop_header
      %s19 = sphi 0, %s23
      %p20 = scmp.ge.s32.totalorder %s19, 4
      %s29 = sphi 0, %s31
      %s32 = sphi 0, %s29
      %s33 = sphi 0, %s32
      %s49 = sphi 0, %s33
      %s53 = sphi 0, %s53
      %s55 = sphi 0, %s53
      %s56 = sphi 0, %s55
      %s70 = sphi 0, %s56
      %s74 = sphi 0, %s74
      %s76 = sphi 0, %s74
      %s77 = sphi 0, %s76
      %s91 = sphi 0, %s77
      %s95 = sphi 0, %s95
      %s97 = sphi 0, %s95
      %s98 = sphi 0, %s97
      %s112 = sphi 0, %s98
      %s116 = sphi 0, %s116
      %s118 = sphi 0, %s116
      %s119 = sphi 0, %s118
      %s133 = sphi 0, %s119
      %s137 = sphi 0, %s137
      %s139 = sphi 0, %s137
      %s140 = sphi 0, %s139
      %s154 = sphi 0, %s140
      %s158 = sphi 0, %s158
      %s160 = sphi 0, %s158
      %s161 = sphi 0, %s160
      %s175 = sphi 0, %s161
      %s179 = sphi 0, %s179
      %s181 = sphi 0, %s179
      %s182 = sphi 0, %s181
      %s196 = sphi 0, %s182
      %s200 = sphi 0, %s200
      %s202 = sphi 0, %s200
      %s203 = sphi 0, %s202
      %s217 = sphi 0, %s203
      %s221 = sphi 0, %s221
      %s223 = sphi 0, %s221
      %s224 = sphi 0, %s223
      %s238 = sphi 0, %s224
      %s244 = sphi 0, %s246
      %s247 = sphi 0, %s244
      %s248 = sphi 0, %s247
      %s264 = sphi 0, %s248
    $region4: #{tpu_custom_call.1} parent=1 // loop_header_branch
      %22 = sbr.rel (%p20) target = $region8
    $region5: #{tpu_custom_call.1} parent=1 // loop_body
      %s24 = ssub.s32 %s19, 1
      %s25 = ssub.s32 %s19, 2
      %s26 = sadd.s32 %s19, 1
      %s27 = ssub.s32 %s19, %s26
      %p28 = scmp.eq.s32.totalorder %s27, 0
      %s30 = sadd.s32 %s29, 1
      %s31 = scalar_select %p28, %s29, %s30
      %p34 = pneg %p28
      %p35 = scmp.eq.s32.totalorder %s19, 1
      %p36 = por %p34, %p35
      %p37 = scmp.ne.s32.totalorder %s29, %s32
      %p38 = scmp.eq.s32.totalorder %s19, 0
      %p39 = por %p37, %p38
      %p40 = scmp.ne.s32.totalorder %s29, %s32
      %p41 = scmp.eq.s32.totalorder %s24, 1
      %p42 = por %p40, %p41
      %p43 = scmp.ne.s32.totalorder %s32, %s33
      %p44 = scmp.eq.s32.totalorder %s24, 0
      %p45 = por %p43, %p44
      %p46 = scmp.ne.s32.totalorder %s32, %s33
      %p47 = scmp.eq.s32.totalorder %s25, 1
      %p48 = por %p46, %p47
      %p50 = scmp.ne.s32.totalorder %s33, %s49
      %p51 = scmp.eq.s32.totalorder %s25, 0
      %p52 = por %p50, %p51
      %s54 = sadd.s32 %s53, 1
      %p57 = scmp.eq.s32.totalorder %s19, 1
      %p58 = scmp.ne.s32.totalorder %s53, %s55
      %p59 = scmp.eq.s32.totalorder %s19, 0
      %p60 = por %p58, %p59
      %p61 = scmp.ne.s32.totalorder %s53, %s55
      %p62 = scmp.eq.s32.totalorder %s24, 1
      %p63 = por %p61, %p62
      %p64 = scmp.ne.s32.totalorder %s55, %s56
      %p65 = scmp.eq.s32.totalorder %s24, 0
      %p66 = por %p64, %p65
      %p67 = scmp.ne.s32.totalorder %s55, %s56
      %p68 = scmp.eq.s32.totalorder %s25, 1
      %p69 = por %p67, %p68
      %p71 = scmp.ne.s32.totalorder %s56, %s70
      %p72 = scmp.eq.s32.totalorder %s25, 0
      %p73 = por %p71, %p72
      %s75 = sadd.s32 %s74, 1
      %p78 = scmp.eq.s32.totalorder %s19, 1
      %p79 = scmp.ne.s32.totalorder %s74, %s76
      %p80 = scmp.eq.s32.totalorder %s19, 0
      %p81 = por %p79, %p80
      %p82 = scmp.ne.s32.totalorder %s74, %s76
      %p83 = scmp.eq.s32.totalorder %s24, 1
      %p84 = por %p82, %p83
      %p85 = scmp.ne.s32.totalorder %s76, %s77
      %p86 = scmp.eq.s32.totalorder %s24, 0
      %p87 = por %p85, %p86
      %p88 = scmp.ne.s32.totalorder %s76, %s77
      %p89 = scmp.eq.s32.totalorder %s25, 1
      %p90 = por %p88, %p89
      %p92 = scmp.ne.s32.totalorder %s77, %s91
      %p93 = scmp.eq.s32.totalorder %s25, 0
      %p94 = por %p92, %p93
      %s96 = sadd.s32 %s95, 1
      %p99 = scmp.eq.s32.totalorder %s19, 1
      %p100 = scmp.ne.s32.totalorder %s95, %s97
      %p101 = scmp.eq.s32.totalorder %s19, 0
      %p102 = por %p100, %p101
      %p103 = scmp.ne.s32.totalorder %s95, %s97
      %p104 = scmp.eq.s32.totalorder %s24, 1
      %p105 = por %p103, %p104
      %p106 = scmp.ne.s32.totalorder %s97, %s98
      %p107 = scmp.eq.s32.totalorder %s24, 0
      %p108 = por %p106, %p107
      %p109 = scmp.ne.s32.totalorder %s97, %s98
      %p110 = scmp.eq.s32.totalorder %s25, 1
      %p111 = por %p109, %p110
      %p113 = scmp.ne.s32.totalorder %s98, %s112
      %p114 = scmp.eq.s32.totalorder %s25, 0
      %p115 = por %p113, %p114
      %s117 = sadd.s32 %s116, 1
      %p120 = scmp.eq.s32.totalorder %s19, 1
      %p121 = scmp.ne.s32.totalorder %s116, %s118
      %p122 = scmp.eq.s32.totalorder %s19, 0
      %p123 = por %p121, %p122
      %p124 = scmp.ne.s32.totalorder %s116, %s118
      %p125 = scmp.eq.s32.totalorder %s24, 1
      %p126 = por %p124, %p125
      %p127 = scmp.ne.s32.totalorder %s118, %s119
      %p128 = scmp.eq.s32.totalorder %s24, 0
      %p129 = por %p127, %p128
      %p130 = scmp.ne.s32.totalorder %s118, %s119
      %p131 = scmp.eq.s32.totalorder %s25, 1
      %p132 = por %p130, %p131
      %p134 = scmp.ne.s32.totalorder %s119, %s133
      %p135 = scmp.eq.s32.totalorder %s25, 0
      %p136 = por %p134, %p135
      %s138 = sadd.s32 %s137, 1
      %p141 = scmp.eq.s32.totalorder %s19, 1
      %p142 = scmp.ne.s32.totalorder %s137, %s139
      %p143 = scmp.eq.s32.totalorder %s19, 0
      %p144 = por %p142, %p143
      %p145 = scmp.ne.s32.totalorder %s137, %s139
      %p146 = scmp.eq.s32.totalorder %s24, 1
      %p147 = por %p145, %p146
      %p148 = scmp.ne.s32.totalorder %s139, %s140
      %p149 = scmp.eq.s32.totalorder %s24, 0
      %p150 = por %p148, %p149
      %p151 = scmp.ne.s32.totalorder %s139, %s140
      %p152 = scmp.eq.s32.totalorder %s25, 1
      %p153 = por %p151, %p152
      %p155 = scmp.ne.s32.totalorder %s140, %s154
      %p156 = scmp.eq.s32.totalorder %s25, 0
      %p157 = por %p155, %p156
      %s159 = sadd.s32 %s158, 1
      %p162 = scmp.eq.s32.totalorder %s19, 1
      %p163 = scmp.ne.s32.totalorder %s158, %s160
      %p164 = scmp.eq.s32.totalorder %s19, 0
      %p165 = por %p163, %p164
      %p166 = scmp.ne.s32.totalorder %s158, %s160
      %p167 = scmp.eq.s32.totalorder %s24, 1
      %p168 = por %p166, %p167
      %p169 = scmp.ne.s32.totalorder %s160, %s161
      %p170 = scmp.eq.s32.totalorder %s24, 0
      %p171 = por %p169, %p170
      %p172 = scmp.ne.s32.totalorder %s160, %s161
      %p173 = scmp.eq.s32.totalorder %s25, 1
      %p174 = por %p172, %p173
      %p176 = scmp.ne.s32.totalorder %s161, %s175
      %p177 = scmp.eq.s32.totalorder %s25, 0
      %p178 = por %p176, %p177
      %s180 = sadd.s32 %s179, 1
      %p183 = scmp.eq.s32.totalorder %s19, 1
      %p184 = scmp.ne.s32.totalorder %s179, %s181
      %p185 = scmp.eq.s32.totalorder %s19, 0
      %p186 = por %p184, %p185
      %p187 = scmp.ne.s32.totalorder %s179, %s181
      %p188 = scmp.eq.s32.totalorder %s24, 1
      %p189 = por %p187, %p188
      %p190 = scmp.ne.s32.totalorder %s181, %s182
      %p191 = scmp.eq.s32.totalorder %s24, 0
      %p192 = por %p190, %p191
      %p193 = scmp.ne.s32.totalorder %s181, %s182
      %p194 = scmp.eq.s32.totalorder %s25, 1
      %p195 = por %p193, %p194
      %p197 = scmp.ne.s32.totalorder %s182, %s196
      %p198 = scmp.eq.s32.totalorder %s25, 0
      %p199 = por %p197, %p198
      %s201 = sadd.s32 %s200, 1
      %p204 = scmp.eq.s32.totalorder %s19, 1
      %p205 = scmp.ne.s32.totalorder %s200, %s202
      %p206 = scmp.eq.s32.totalorder %s19, 0
      %p207 = por %p205, %p206
      %p208 = scmp.ne.s32.totalorder %s200, %s202
      %p209 = scmp.eq.s32.totalorder %s24, 1
      %p210 = por %p208, %p209
      %p211 = scmp.ne.s32.totalorder %s202, %s203
      %p212 = scmp.eq.s32.totalorder %s24, 0
      %p213 = por %p211, %p212
      %p214 = scmp.ne.s32.totalorder %s202, %s203
      %p215 = scmp.eq.s32.totalorder %s25, 1
      %p216 = por %p214, %p215
      %p218 = scmp.ne.s32.totalorder %s203, %s217
      %p219 = scmp.eq.s32.totalorder %s25, 0
      %p220 = por %p218, %p219
      %s222 = sadd.s32 %s221, 1
      %p225 = scmp.eq.s32.totalorder %s19, 1
      %p226 = scmp.ne.s32.totalorder %s221, %s223
      %p227 = scmp.eq.s32.totalorder %s19, 0
      %p228 = por %p226, %p227
      %p229 = scmp.ne.s32.totalorder %s221, %s223
      %p230 = scmp.eq.s32.totalorder %s24, 1
      %p231 = por %p229, %p230
      %p232 = scmp.ne.s32.totalorder %s223, %s224
      %p233 = scmp.eq.s32.totalorder %s24, 0
      %p234 = por %p232, %p233
      %p235 = scmp.ne.s32.totalorder %s223, %s224
      %p236 = scmp.eq.s32.totalorder %s25, 1
      %p237 = por %p235, %p236
      %p239 = scmp.ne.s32.totalorder %s224, %s238
      %p240 = scmp.eq.s32.totalorder %s25, 0
      %p241 = por %p239, %p240
      %s242 = ssub.s32 %s19, %s26
      %p243 = scmp.eq.s32.totalorder %s242, 0
      %s245 = sadd.s32 %s244, 1
      %s246 = scalar_select %p243, %s244, %s245
      %p249 = pneg %p243
      %p250 = scmp.eq.s32.totalorder %s19, 1
      %p251 = por %p249, %p250
      %p252 = scmp.ne.s32.totalorder %s244, %s247
      %p253 = scmp.eq.s32.totalorder %s19, 0
      %p254 = por %p252, %p253
      %p255 = scmp.ne.s32.totalorder %s244, %s247
      %p256 = scmp.eq.s32.totalorder %s24, 1
      %p257 = por %p255, %p256
      %p258 = scmp.ne.s32.totalorder %s247, %s248
      %p259 = scmp.eq.s32.totalorder %s24, 0
      %p260 = por %p258, %p259
      %p261 = scmp.ne.s32.totalorder %s247, %s248
      %p262 = scmp.eq.s32.totalorder %s25, 1
      %p263 = por %p261, %p262
      %p265 = scmp.ne.s32.totalorder %s248, %s264
      %p266 = scmp.eq.s32.totalorder %s25, 0
      %p267 = por %p265, %p266
      %p268 = scmp.le.s32.totalorder 1, %s19
      %p269 = scmp.lt.s32.totalorder %s19, 3
      %p270 = pnand %p268, %p269
      %p271 = pneg %p270
      // Predicated region
      $region9: #{tpu_custom_call.1} parent=5 // pred_check
        _
      $region10: #{tpu_custom_call.1} parent=5 // pred_check_branch
        %273 = sbr.rel (%p270) target = $region12
      $region11: #{tpu_custom_call.1} parent=5 // pred_region
        %s274 = ssub.s32 %s19, 1
        // Predicated region
        $region13: #{tpu_custom_call.1} parent=11 // pred_check
          %p275 = pneg %p66
        $region14: #{tpu_custom_call.1} parent=11 // pred_check_branch
          %277 = sbr.rel (%p275) target = $region16
        $region15: #{tpu_custom_call.1} parent=11 // pred_region
          _
        $region16: #{tpu_custom_call.1} parent=11 // pred_fallthru
          _
        // Predicated region
        $region17: #{tpu_custom_call.1} parent=11 // pred_check
          %p278 = pneg %p87
        $region18: #{tpu_custom_call.1} parent=11 // pred_check_branch
          %280 = sbr.rel (%p278) target = $region20
        $region19: #{tpu_custom_call.1} parent=11 // pred_region
          _
        $region20: #{tpu_custom_call.1} parent=11 // pred_fallthru
          _
        // Predicated region
        $region21: #{tpu_custom_call.1} parent=11 // pred_check
          %p281 = pneg %p108
        $region22: #{tpu_custom_call.1} parent=11 // pred_check_branch
          %283 = sbr.rel (%p281) target = $region24
        $region23: #{tpu_custom_call.1} parent=11 // pred_region
          _
        $region24: #{tpu_custom_call.1} parent=11 // pred_fallthru
          _
        // Predicated region
        $region25: #{tpu_custom_call.1} parent=11 // pred_check
          %p284 = pneg %p129
        $region26: #{tpu_custom_call.1} parent=11 // pred_check_branch
          %286 = sbr.rel (%p284) target = $region28
        $region27: #{tpu_custom_call.1} parent=11 // pred_region
          _
        $region28: #{tpu_custom_call.1} parent=11 // pred_fallthru
          _
        // Predicated region
        $region29: #{tpu_custom_call.1} parent=11 // pred_check
          %p287 = pneg %p150
        $region30: #{tpu_custom_call.1} parent=11 // pred_check_branch
          %289 = sbr.rel (%p287) target = $region32
        $region31: #{tpu_custom_call.1} parent=11 // pred_region
          _
        $region32: #{tpu_custom_call.1} parent=11 // pred_fallthru
          _
        // Predicated region
        $region33: #{tpu_custom_call.1} parent=11 // pred_check
          %p290 = pneg %p171
        $region34: #{tpu_custom_call.1} parent=11 // pred_check_branch
          %292 = sbr.rel (%p290) target = $region36
        $region35: #{tpu_custom_call.1} parent=11 // pred_region
          _
        $region36: #{tpu_custom_call.1} parent=11 // pred_fallthru
          _
        // Predicated region
        $region37: #{tpu_custom_call.1} parent=11 // pred_check
          %p293 = pneg %p192
        $region38: #{tpu_custom_call.1} parent=11 // pred_check_branch
          %295 = sbr.rel (%p293) target = $region40
        $region39: #{tpu_custom_call.1} parent=11 // pred_region
          _
        $region40: #{tpu_custom_call.1} parent=11 // pred_fallthru
          _
        // Predicated region
        $region41: #{tpu_custom_call.1} parent=11 // pred_check
          %p296 = pneg %p213
        $region42: #{tpu_custom_call.1} parent=11 // pred_check_branch
          %298 = sbr.rel (%p296) target = $region44
        $region43: #{tpu_custom_call.1} parent=11 // pred_region
          _
        $region44: #{tpu_custom_call.1} parent=11 // pred_fallthru
          _
        // Predicated region
        $region45: #{tpu_custom_call.1} parent=11 // pred_check
          %p299 = pneg %p234
        $region46: #{tpu_custom_call.1} parent=11 // pred_check_branch
          %301 = sbr.rel (%p299) target = $region48
        $region47: #{tpu_custom_call.1} parent=11 // pred_region
          _
        $region48: #{tpu_custom_call.1} parent=11 // pred_fallthru
          _
      $region12: #{tpu_custom_call.1} parent=5 // pred_fallthru
        _
      %p302 = scmp.lt.s32.totalorder %s19, 2
      // Predicated region
      $region49: #{tpu_custom_call.1} parent=5 // pred_check
        %p303 = pneg %p302
      $region50: #{tpu_custom_call.1} parent=5 // pred_check_branch
        %305 = sbr.rel (%p303) target = $region52
      $region51: #{tpu_custom_call.1} parent=5 // pred_region
        // Predicated region
        $region53: #{tpu_custom_call.1} parent=51 // pred_check
          %p306 = pneg %p39
        $region54: #{tpu_custom_call.1} parent=51 // pred_check_branch
          %308 = sbr.rel (%p306) target = $region56
        $region55: #{tpu_custom_call.1} parent=51 // pred_region
          %p309 = scmp.lt.s32.totalorder %s19, 1
          %s310 = scalar_select %p309, %s19, 1
          %s311 = smul.addr %s310, 18
          %s312 = smul.addr %s311, 4
          %s313 = scalar_lea.vmem %s0, %s312
        $region56: #{tpu_custom_call.1} parent=51 // pred_fallthru
          _
      $region52: #{tpu_custom_call.1} parent=5 // pred_fallthru
        _
      %p314 = scmp.le.s32.totalorder 1, %s19
      %p315 = scmp.lt.s32.totalorder %s19, 3
      %p316 = pnand %p314, %p315
      %p317 = pneg %p316
      // Predicated region
      $region57: #{tpu_custom_call.1} parent=5 // pred_check
        _
      $region58: #{tpu_custom_call.1} parent=5 // pred_check_branch
        %319 = sbr.rel (%p316) target = $region60
      $region59: #{tpu_custom_call.1} parent=5 // pred_region
        %s320 = ssub.s32 %s19, 1
        %p321 = scmp.lt.s32.totalorder %s24, 1
        %s322 = scalar_select %p321, %s24, 1
        %s323 = smul.addr %s322, 18
        %s324 = smul.addr %s323, 4
        %s325 = scalar_lea.vmem %s0, %s324
        %p326 = pneg %p45
        %p327 = pneg %p42
        %p328 = pneg %p66
        %p329 = pneg %p63
        %p330 = pneg %p87
        %p331 = pneg %p84
        %p332 = pneg %p108
        %p333 = pneg %p105
        %p334 = pneg %p129
        %p335 = pneg %p126
        %p336 = pneg %p150
        %p337 = pneg %p147
        %p338 = pneg %p171
        %p339 = pneg %p168
        %p340 = pneg %p192
        %p341 = pneg %p189
        %p342 = pneg %p213
        %p343 = pneg %p210
        %p344 = pneg %p234
        %p345 = pneg %p231
        %p346 = pneg %p260
        %p347 = pneg %p257
        %s348 = sand.u32 %s247, 1
        %s349 = scalar_lea.sflag [#allocation4], %s348
        %s350 = sand.u32 %s247, 1
        %s351 = smul.addr %s350, 64
        %s352 = scalar_lea.vmem [#allocation3], %s351
        %p353 = scmp.lt.s32.totalorder %s24, 1
        %s354 = scalar_select %p353, %s24, 1
        %s355 = smul.addr %s354, 18
        %s356 = smul.addr %s355, 4
        %s357 = scalar_lea.vmem %s0, %s356
        %v359 = vld [vmem:[%s357] sm:$0xf]
        %v360 = vld [vmem:[%s357 + $0x8] sm:$0xf]
        %v361 = vld [vmem:[%s357 + $0x10] sm:$0xf]
        %v362 = vld [vmem:[%s357 + $0x18] sm:$0xf]
        %v363 = vld [vmem:[%s357 + $0x20] sm:$0xf]
        %v364 = vld [vmem:[%s357 + $0x28] sm:$0xf]
        %v365 = vld [vmem:[%s357 + $0x30] sm:$0xf]
        %v366 = vld [vmem:[%s357 + $0x38] sm:$0xf]
        %v367 = vld [vmem:[%s357 + $0x4] sm:$0x1]
        %v368 = vld [vmem:[%s357 + $0xc] sm:$0x1]
        %v369 = vld [vmem:[%s357 + $0x14] sm:$0x1]
        %v370 = vld [vmem:[%s357 + $0x1c] sm:$0x1]
        %v371 = vld [vmem:[%s357 + $0x24] sm:$0x1]
        %v372 = vld [vmem:[%s357 + $0x2c] sm:$0x1]
        %v373 = vld [vmem:[%s357 + $0x34] sm:$0x1]
        %v374 = vld [vmem:[%s357 + $0x3c] sm:$0x1]
        %vm375 = vsmask.f32 3328
        %vm376 = vsmask.f32 7440
        %vm377 = vmor %vm375, %vm376
        %v379 = vshrl.u32 %v359, 16
        %v381 = vrot.slane %v379, 4
        %v382 = vshll.u32 %v359, 16
        %v384 = vrot.slane %v382, 5
        %v385 = vor.u32 %v381, %v384
        %v386 = vrot.slane %v385, 4
        %v388 = vshll.u32 %v367, 16
        %v390 = vrot.slane %v388, 5
        %v391 = vsel %vm377, %v386, %v390
        %v393 = vshrl.u32 %v360, 16
        %v395 = vrot.slane %v393, 4
        %v396 = vshll.u32 %v360, 16
        %v398 = vrot.slane %v396, 5
        %v399 = vor.u32 %v395, %v398
        %v400 = vrot.slane %v399, 4
        %v402 = vshll.u32 %v368, 16
        %v404 = vrot.slane %v402, 5
        %v405 = vsel %vm377, %v400, %v404
        %v407 = vshrl.u32 %v361, 16
        %v409 = vrot.slane %v407, 4
        %v410 = vshll.u32 %v361, 16
        %v412 = vrot.slane %v410, 5
        %v413 = vor.u32 %v409, %v412
        %v414 = vrot.slane %v413, 4
        %v416 = vshll.u32 %v369, 16
        %v418 = vrot.slane %v416, 5
        %v419 = vsel %vm377, %v414, %v418
        %v421 = vshrl.u32 %v362, 16
        %v423 = vrot.slane %v421, 4
        %v424 = vshll.u32 %v362, 16
        %v426 = vrot.slane %v424, 5
        %v427 = vor.u32 %v423, %v426
        %v428 = vrot.slane %v427, 4
        %v430 = vshll.u32 %v370, 16
        %v432 = vrot.slane %v430, 5
        %v433 = vsel %vm377, %v428, %v432
        %v435 = vshrl.u32 %v363, 16
        %v437 = vrot.slane %v435, 4
        %v438 = vshll.u32 %v363, 16
        %v440 = vrot.slane %v438, 5
        %v441 = vor.u32 %v437, %v440
        %v442 = vrot.slane %v441, 4
        %v444 = vshll.u32 %v371, 16
        %v446 = vrot.slane %v444, 5
        %v447 = vsel %vm377, %v442, %v446
        %v449 = vshrl.u32 %v364, 16
        %v451 = vrot.slane %v449, 4
        %v452 = vshll.u32 %v364, 16
        %v454 = vrot.slane %v452, 5
        %v455 = vor.u32 %v451, %v454
        %v456 = vrot.slane %v455, 4
        %v458 = vshll.u32 %v372, 16
        %v460 = vrot.slane %v458, 5
        %v461 = vsel %vm377, %v456, %v460
        %v463 = vshrl.u32 %v365, 16
        %v465 = vrot.slane %v463, 4
        %v466 = vshll.u32 %v365, 16
        %v468 = vrot.slane %v466, 5
        %v469 = vor.u32 %v465, %v468
        %v470 = vrot.slane %v469, 4
        %v472 = vshll.u32 %v373, 16
        %v474 = vrot.slane %v472, 5
        %v475 = vsel %vm377, %v470, %v474
        %v477 = vshrl.u32 %v366, 16
        %v479 = vrot.slane %v477, 4
        %v480 = vshll.u32 %v366, 16
        %v482 = vrot.slane %v480, 5
        %v483 = vor.u32 %v479, %v482
        %v484 = vrot.slane %v483, 4
        %v486 = vshll.u32 %v374, 16
        %v488 = vrot.slane %v486, 5
        %v489 = vsel %vm377, %v484, %v488
        %s490 = scalar_lea.vmem %s357, 8
        %v491 = vld [vmem:[%s490] sm:$0xf]
        %v492 = vld [vmem:[%s490 + $0x8] sm:$0xf]
        %v493 = vld [vmem:[%s490 + $0x10] sm:$0xf]
        %v494 = vld [vmem:[%s490 + $0x18] sm:$0xf]
        %v495 = vld [vmem:[%s490 + $0x20] sm:$0xf]
        %v496 = vld [vmem:[%s490 + $0x28] sm:$0xf]
        %v497 = vld [vmem:[%s490 + $0x30] sm:$0xf]
        %v498 = vld [vmem:[%s490 + $0x38] sm:$0xf]
        %v499 = vld [vmem:[%s490 + $0x4] sm:$0x1]
        %v500 = vld [vmem:[%s490 + $0xc] sm:$0x1]
        %v501 = vld [vmem:[%s490 + $0x14] sm:$0x1]
        %v502 = vld [vmem:[%s490 + $0x1c] sm:$0x1]
        %v503 = vld [vmem:[%s490 + $0x24] sm:$0x1]
        %v504 = vld [vmem:[%s490 + $0x2c] sm:$0x1]
        %v505 = vld [vmem:[%s490 + $0x34] sm:$0x1]
        %v506 = vld [vmem:[%s490 + $0x3c] sm:$0x1]
        %v508 = vshrl.u32 %v491, 16
        %v510 = vrot.slane %v508, 4
        %v511 = vshll.u32 %v491, 16
        %v513 = vrot.slane %v511, 5
        %v514 = vor.u32 %v510, %v513
        %v515 = vrot.slane %v514, 4
        %v517 = vshll.u32 %v499, 16
        %v519 = vrot.slane %v517, 5
        %v520 = vsel %vm377, %v515, %v519
        %v522 = vshrl.u32 %v492, 16
        %v524 = vrot.slane %v522, 4
        %v525 = vshll.u32 %v492, 16
        %v527 = vrot.slane %v525, 5
        %v528 = vor.u32 %v524, %v527
        %v529 = vrot.slane %v528, 4
        %v531 = vshll.u32 %v500, 16
        %v533 = vrot.slane %v531, 5
        %v534 = vsel %vm377, %v529, %v533
        %v536 = vshrl.u32 %v493, 16
        %v538 = vrot.slane %v536, 4
        %v539 = vshll.u32 %v493, 16
        %v541 = vrot.slane %v539, 5
        %v542 = vor.u32 %v538, %v541
        %v543 = vrot.slane %v542, 4
        %v545 = vshll.u32 %v501, 16
        %v547 = vrot.slane %v545, 5
        %v548 = vsel %vm377, %v543, %v547
        %v550 = vshrl.u32 %v494, 16
        %v552 = vrot.slane %v550, 4
        %v553 = vshll.u32 %v494, 16
        %v555 = vrot.slane %v553, 5
        %v556 = vor.u32 %v552, %v555
        %v557 = vrot.slane %v556, 4
        %v559 = vshll.u32 %v502, 16
        %v561 = vrot.slane %v559, 5
        %v562 = vsel %vm377, %v557, %v561
        %v564 = vshrl.u32 %v495, 16
        %v566 = vrot.slane %v564, 4
        %v567 = vshll.u32 %v495, 16
        %v569 = vrot.slane %v567, 5
        %v570 = vor.u32 %v566, %v569
        %v571 = vrot.slane %v570, 4
        %v573 = vshll.u32 %v503, 16
        %v575 = vrot.slane %v573, 5
        %v576 = vsel %vm377, %v571, %v575
        %v578 = vshrl.u32 %v496, 16
        %v580 = vrot.slane %v578, 4
        %v581 = vshll.u32 %v496, 16
        %v583 = vrot.slane %v581, 5
        %v584 = vor.u32 %v580, %v583
        %v585 = vrot.slane %v584, 4
        %v587 = vshll.u32 %v504, 16
        %v589 = vrot.slane %v587, 5
        %v590 = vsel %vm377, %v585, %v589
        %v592 = vshrl.u32 %v497, 16
        %v594 = vrot.slane %v592, 4
        %v595 = vshll.u32 %v497, 16
        %v597 = vrot.slane %v595, 5
        %v598 = vor.u32 %v594, %v597
        %v599 = vrot.slane %v598, 4
        %v601 = vshll.u32 %v505, 16
        %v603 = vrot.slane %v601, 5
        %v604 = vsel %vm377, %v599, %v603
        %v606 = vshrl.u32 %v498, 16
        %v608 = vrot.slane %v606, 4
        %v609 = vshll.u32 %v498, 16
        %v611 = vrot.slane %v609, 5
        %v612 = vor.u32 %v608, %v611
        %v613 = vrot.slane %v612, 4
        %v615 = vshll.u32 %v506, 16
        %v617 = vrot.slane %v615, 5
        %v618 = vsel %vm377, %v613, %v617
        %v627 = vunpack.c.l.b16 %v359
        %v628 = vunpack.c.l.b16 %v360
        %v629 = vunpack.c.l.b16 %v361
        %v630 = vunpack.c.l.b16 %v362
        %v631 = vunpack.c.l.b16 %v363
        %v632 = vunpack.c.l.b16 %v364
        %v633 = vunpack.c.l.b16 %v365
        %v634 = vunpack.c.l.b16 %v366
        %v635 = vpack.c.b16 %v628, %v627
        %v636 = vpack.c.b16 %v630, %v629
        %v637 = vpack.c.b16 %v632, %v631
        %v638 = vpack.c.b16 %v634, %v633
        %v639 = vunpack.c.l.b16 %v391
        %v640 = vunpack.c.l.b16 %v405
        %v641 = vunpack.c.l.b16 %v419
        %v642 = vunpack.c.l.b16 %v433
        %v643 = vunpack.c.l.b16 %v447
        %v644 = vunpack.c.l.b16 %v461
        %v645 = vunpack.c.l.b16 %v475
        %v646 = vunpack.c.l.b16 %v489
        %v647 = vpack.c.b16 %v640, %v639
        %v648 = vpack.c.b16 %v642, %v641
        %v649 = vpack.c.b16 %v644, %v643
        %v650 = vpack.c.b16 %v646, %v645
        %651 = vrot.lane.b32.xlu0 %v647, 16
        %v652 = vpop.permute.xlu0 %651
        %653 = vrot.lane.b32.xlu0 %v648, 16
        %v654 = vpop.permute.xlu0 %653
        %655 = vrot.lane.b32.xlu0 %v649, 16
        %v656 = vpop.permute.xlu0 %655
        %657 = vrot.lane.b32.xlu0 %v650, 16
        %v658 = vpop.permute.xlu0 %657
        %659 = vrot.lane.b32.xlu0 %v635, 8
        %v660 = vpop.permute.xlu0 %659
        %661 = vrot.lane.b32.xlu0 %v636, 8
        %v662 = vpop.permute.xlu0 %661
        %663 = vrot.lane.b32.xlu0 %v637, 8
        %v664 = vpop.permute.xlu0 %663
        %665 = vrot.lane.b32.xlu0 %v638, 8
        %v666 = vpop.permute.xlu0 %665
        %667 = vrot.lane.b32.xlu0 %v647, 24
        %v668 = vpop.permute.xlu0 %667
        %669 = vrot.lane.b32.xlu0 %v648, 24
        %v670 = vpop.permute.xlu0 %669
        %671 = vrot.lane.b32.xlu0 %v649, 24
        %v672 = vpop.permute.xlu0 %671
        %673 = vrot.lane.b32.xlu0 %v650, 24
        %v674 = vpop.permute.xlu0 %673
        %v683 = vunpack.c.l.b16 %v491
        %v684 = vunpack.c.l.b16 %v492
        %v685 = vunpack.c.l.b16 %v493
        %v686 = vunpack.c.l.b16 %v494
        %v687 = vunpack.c.l.b16 %v495
        %v688 = vunpack.c.l.b16 %v496
        %v689 = vunpack.c.l.b16 %v497
        %v690 = vunpack.c.l.b16 %v498
        %v691 = vpack.c.b16 %v684, %v683
        %v692 = vpack.c.b16 %v686, %v685
        %v693 = vpack.c.b16 %v688, %v687
        %v694 = vpack.c.b16 %v690, %v689
        %695 = vrot.lane.b32.xlu0 %v691, 48
        %v696 = vpop.permute.xlu0 %695
        %697 = vrot.lane.b32.xlu0 %v692, 48
        %v698 = vpop.permute.xlu0 %697
        %699 = vrot.lane.b32.xlu0 %v693, 48
        %v700 = vpop.permute.xlu0 %699
        %701 = vrot.lane.b32.xlu0 %v694, 48
        %v702 = vpop.permute.xlu0 %701
        %v703 = vunpack.c.l.b16 %v520
        %v704 = vunpack.c.l.b16 %v534
        %v705 = vunpack.c.l.b16 %v548
        %v706 = vunpack.c.l.b16 %v562
        %v707 = vunpack.c.l.b16 %v576
        %v708 = vunpack.c.l.b16 %v590
        %v709 = vunpack.c.l.b16 %v604
        %v710 = vunpack.c.l.b16 %v618
        %v711 = vpack.c.b16 %v704, %v703
        %v712 = vpack.c.b16 %v706, %v705
        %v713 = vpack.c.b16 %v708, %v707
        %v714 = vpack.c.b16 %v710, %v709
        %715 = vrot.lane.b32.xlu0 %v711, 64
        %v716 = vpop.permute.xlu0 %715
        %717 = vrot.lane.b32.xlu0 %v712, 64
        %v718 = vpop.permute.xlu0 %717
        %719 = vrot.lane.b32.xlu0 %v713, 64
        %v720 = vpop.permute.xlu0 %719
        %721 = vrot.lane.b32.xlu0 %v714, 64
        %v722 = vpop.permute.xlu0 %721
        %vm723 = vcmask 64512
        %vm728 = vcmask 130048
        %v730 = vsel %vm728, %v635, %v652
        %v732 = vsel %vm728, %v636, %v654
        %v734 = vsel %vm728, %v637, %v656
        %v736 = vsel %vm728, %v638, %v658
        %vm737 = vcmask 195584
        %v739 = vsel %vm737, %v730, %v660
        %v741 = vsel %vm737, %v732, %v662
        %v743 = vsel %vm737, %v734, %v664
        %v745 = vsel %vm737, %v736, %v666
        %vm746 = vcmask 261120
        %v747 = vsel %vm746, %v739, %v660
        %v748 = vsel %vm746, %v741, %v662
        %v749 = vsel %vm746, %v743, %v664
        %v750 = vsel %vm746, %v745, %v666
        %vm751 = vcmask 326656
        %v753 = vsel %vm751, %v747, %v668
        %v755 = vsel %vm751, %v748, %v670
        %v757 = vsel %vm751, %v749, %v672
        %v759 = vsel %vm751, %v750, %v674
        %vm760 = vcmask 392192
        %v762 = vsel %vm760, %v753, %v696
        %v764 = vsel %vm760, %v755, %v698
        %v766 = vsel %vm760, %v757, %v700
        %v768 = vsel %vm760, %v759, %v702
        %vm769 = vcmask 457728
        %v770 = vsel %vm769, %v762, %v696
        %v771 = vsel %vm769, %v764, %v698
        %v772 = vsel %vm769, %v766, %v700
        %v773 = vsel %vm769, %v768, %v702
        %vm774 = vcmask 523264
        %v776 = vsel %vm774, %v770, %v716
        %v778 = vsel %vm774, %v771, %v718
        %v780 = vsel %vm774, %v772, %v720
        %v782 = vsel %vm774, %v773, %v722
        %v783 = vld [vmem:[%s1] sm:$0xf]
        %v784 = vld [vmem:[%s1 + $0x4] sm:$0xf]
        %v785 = vld [vmem:[%s1 + $0x8] sm:$0xf]
        %v786 = vld [vmem:[%s1 + $0xc] sm:$0xf]
        %v787 = vld [vmem:[%s1 + $0x10] sm:$0xf]
        %v788 = vld [vmem:[%s1 + $0x14] sm:$0xf]
        %v789 = vld [vmem:[%s1 + $0x18] sm:$0xf]
        %v790 = vld [vmem:[%s1 + $0x1c] sm:$0xf]
        %v791 = vld [vmem:[%s1 + $0x20] sm:$0xf]
        %v801 = vunpack.c.l.b16 %v783
        %v802 = vunpack.c.l.b16 %v784
        %v803 = vunpack.c.l.b16 %v785
        %v804 = vunpack.c.l.b16 %v786
        %v805 = vunpack.c.l.b16 %v787
        %v806 = vunpack.c.l.b16 %v788
        %v807 = vunpack.c.l.b16 %v789
        %v808 = vunpack.c.l.b16 %v790
        %v809 = vunpack.c.l.b16 %v791
        %v810 = vpack.c.b16 %v802, %v801
        %v811 = vpack.c.b16 %v804, %v803
        %v812 = vpack.c.b16 %v806, %v805
        %v813 = vpack.c.b16 %v808, %v807
        %v814 = vpack.c.b16 %v809, %v809
        %vm819 = vcmask 588800
        %v820 = vsel %vm819, %v776, 0
        %v822 = vsel %vm819, %v778, 0
        %v824 = vsel %vm819, %v780, 0
        %v826 = vsel %vm819, %v782, 0
        %vm828 = vcmask 1043456
        %v830 = vsel %vm828, %v814, 0
        %832 = vmatprep.subr.bf16.mxu0 0
        %833 = vmatpush1.bf16.msra.mxu0 0
        %834 = vmatprep.subr.bf16.mxu0 0
        %835 = vmatpush1.bf16.msra.mxu0 0
        %836 = vmatprep.subr.bf16.mxu0 0
        %837 = vmatpush1.bf16.msra.mxu0 0
        %838 = vmatprep.subr.bf16.mxu0 0
        %839 = vmatpush1.bf16.msra.mxu0 %v830
        %840 = vmatprep.subr.bf16.mxu0 0
        %841 = vmatpush1.bf16.msra.mxu0 %v813
        %842 = vmatprep.subr.bf16.mxu0 0
        %843 = vmatpush1.bf16.msra.mxu0 %v812
        %844 = vmatprep.subr.bf16.mxu0 0
        %845 = vmatpush1.bf16.msra.mxu0 %v811
        %846 = vmatprep.subr.bf16.mxu0 0
        %847 = vmatpush1.bf16.msra.mxu0 %v810
        %848 = vmatprep.subr.bf16.mxu0 0
        %849 = vmatpush2.bf16.msra.mxu0 0
        %850 = vmatprep.subr.bf16.mxu0 0
        %851 = vmatpush2.bf16.msra.mxu0 0
        %852 = vmatprep.subr.bf16.mxu0 0
        %853 = vmatpush2.bf16.msra.mxu0 0
        %854 = vmatprep.subr.bf16.mxu0 0
        %855 = vmatpush2.bf16.msra.mxu0 0
        %856 = vmatprep.subr.bf16.mxu0 0
        %857 = vmatpush2.bf16.msra.mxu0 0
        %858 = vmatprep.subr.bf16.mxu0 0
        %859 = vmatpush2.bf16.msra.mxu0 0
        %860 = vmatprep.subr.bf16.mxu0 0
        %861 = vmatpush2.bf16.msra.mxu0 0
        %862 = vmatprep.subr.bf16.mxu0 0
        %863 = vmatpush2.bf16.msra.mxu0 0
        %864 = vmatprep.mubr.bf16.mxu0 0
        %865 = vmatmul.mubr.bf16.gmra.mxu0 %v820
        %v866 = vpop.f32.mrf.mxu0
        %v867 = vadd.f32 0.0, %v866
        %v868 = vpop.f32.mrf.mxu0
        %v869 = vpop.f32.mrf.mxu0
        %v870 = vadd.f32 0.0, %v869
        %v871 = vpop.f32.mrf.mxu0
        %872 = vmatprep.mubr.bf16.mxu0 0
        %873 = vmatmul.mubr.bf16.gmra.mxu0 %v822
        %v874 = vpop.f32.mrf.mxu0
        %v875 = vadd.f32 0.0, %v874
        %v876 = vpop.f32.mrf.mxu0
        %v877 = vpop.f32.mrf.mxu0
        %v878 = vadd.f32 0.0, %v877
        %v879 = vpop.f32.mrf.mxu0
        %880 = vmatprep.mubr.bf16.mxu0 0
        %881 = vmatmul.mubr.bf16.gmra.mxu0 %v824
        %v882 = vpop.f32.mrf.mxu0
        %v883 = vadd.f32 0.0, %v882
        %v884 = vpop.f32.mrf.mxu0
        %v885 = vpop.f32.mrf.mxu0
        %v886 = vadd.f32 0.0, %v885
        %v887 = vpop.f32.mrf.mxu0
        %888 = vmatprep.mubr.bf16.mxu0 0
        %889 = vmatmul.mubr.bf16.gmra.mxu0 %v826
        %v890 = vpop.f32.mrf.mxu0
        %v891 = vadd.f32 0.0, %v890
        %v892 = vpop.f32.mrf.mxu0
        %v893 = vpop.f32.mrf.mxu0
        %v894 = vadd.f32 0.0, %v893
        %v895 = vpop.f32.mrf.mxu0
        %896 = vdwg.mxu0
        %v897 = vld [vmem:[%s2] sm:$0x1]
        %v899 = vlaneseq
        %v900 = vshrl.u32 %v899, 7
        %v901 = vsub.s32 0, %v900
        %v902 = vrot.slane %v897, %v901
        %v904 = vmul.f32 %v867, %v902
        %v905 = vmul.f32 %v870, %v902
        %v906 = vmul.f32 %v875, %v902
        %v907 = vmul.f32 %v878, %v902
        %v908 = vmul.f32 %v883, %v902
        %v909 = vmul.f32 %v886, %v902
        %v910 = vmul.f32 %v891, %v902
        %v911 = vmul.f32 %v894, %v902
        %v912 = vld [vmem:[%s3] sm:$0x1]
        %v914 = vlaneseq
        %v915 = vshrl.u32 %v914, 7
        %v916 = vsub.s32 0, %v915
        %v917 = vrot.slane %v912, %v916
        %v919 = vadd.f32 %v904, %v917
        %v920 = vadd.f32 %v905, %v917
        %v921 = vadd.f32 %v906, %v917
        %v922 = vadd.f32 %v907, %v917
        %v923 = vadd.f32 %v908, %v917
        %v924 = vadd.f32 %v909, %v917
        %v925 = vadd.f32 %v910, %v917
        %v926 = vadd.f32 %v911, %v917
        %v927 = vmax.f32 %v919, 0.0
        %v928 = vmax.f32 %v920, 0.0
        %v929 = vmax.f32 %v921, 0.0
        %v930 = vmax.f32 %v922, 0.0
        %v931 = vmax.f32 %v923, 0.0
        %v932 = vmax.f32 %v924, 0.0
        %v933 = vmax.f32 %v925, 0.0
        %v934 = vmax.f32 %v926, 0.0
        %vm935 = vcmask 125952
        %936 = vst.msk [vmem:[#allocation2] sm:$0xf] %vm935, 0
        %vm937 = vcmask 122880
        %938 = vst.msk [vmem:[#allocation2 + $0x4] sm:$0x1] %vm937, 0
        %s939 = scalar_lea.vmem [#allocation2], 72
        %940 = vst.msk [vmem:[%s939] sm:$0xf] %vm935, 0
        %941 = vst.msk [vmem:[%s939 + $0x4] sm:$0x1] %vm937, 0
        %s942 = scalar_lea.vmem [#allocation2], 8
        %vm943 = vcmask 122880
        %vm944 = vsmask.f32 256
        %vm945 = vmand %vm943, %vm944
        %v946 = vld [vmem:[%s942] sm:$0x1]
        %v947 = vsel %vm945, 0, %v946
        %948 = vst [vmem:[%s942] sm:$0x1] %v947
        %v949 = vld [vmem:[%s942 + $0x8] sm:$0x1]
        %v950 = vsel %vm945, 0, %v949
        %951 = vst [vmem:[%s942 + $0x8] sm:$0x1] %v950
        %v952 = vld [vmem:[%s942 + $0x10] sm:$0x1]
        %v953 = vsel %vm945, 0, %v952
        %954 = vst [vmem:[%s942 + $0x10] sm:$0x1] %v953
        %v955 = vld [vmem:[%s942 + $0x18] sm:$0x1]
        %v956 = vsel %vm945, 0, %v955
        %957 = vst [vmem:[%s942 + $0x18] sm:$0x1] %v956
        %v958 = vld [vmem:[%s942 + $0x20] sm:$0x1]
        %v959 = vsel %vm945, 0, %v958
        %960 = vst [vmem:[%s942 + $0x20] sm:$0x1] %v959
        %v961 = vld [vmem:[%s942 + $0x28] sm:$0x1]
        %v962 = vsel %vm945, 0, %v961
        %963 = vst [vmem:[%s942 + $0x28] sm:$0x1] %v962
        %v964 = vld [vmem:[%s942 + $0x30] sm:$0x1]
        %v965 = vsel %vm945, 0, %v964
        %966 = vst [vmem:[%s942 + $0x30] sm:$0x1] %v965
        %v967 = vld [vmem:[%s942 + $0x38] sm:$0x1]
        %v968 = vsel %vm945, 0, %v967
        %969 = vst [vmem:[%s942 + $0x38] sm:$0x1] %v968
        %vm970 = vsmask.f32 7938
        %vm971 = vmand %vm943, %vm970
        %v972 = vld [vmem:[%s942 + $0x4] sm:$0x1]
        %v973 = vsel %vm971, 0, %v972
        %974 = vst [vmem:[%s942 + $0x4] sm:$0x1] %v973
        %v975 = vld [vmem:[%s942 + $0xc] sm:$0x1]
        %v976 = vsel %vm971, 0, %v975
        %977 = vst [vmem:[%s942 + $0xc] sm:$0x1] %v976
        %v978 = vld [vmem:[%s942 + $0x14] sm:$0x1]
        %v979 = vsel %vm971, 0, %v978
        %980 = vst [vmem:[%s942 + $0x14] sm:$0x1] %v979
        %v981 = vld [vmem:[%s942 + $0x1c] sm:$0x1]
        %v982 = vsel %vm971, 0, %v981
        %983 = vst [vmem:[%s942 + $0x1c] sm:$0x1] %v982
        %v984 = vld [vmem:[%s942 + $0x24] sm:$0x1]
        %v985 = vsel %vm971, 0, %v984
        %986 = vst [vmem:[%s942 + $0x24] sm:$0x1] %v985
        %v987 = vld [vmem:[%s942 + $0x2c] sm:$0x1]
        %v988 = vsel %vm971, 0, %v987
        %989 = vst [vmem:[%s942 + $0x2c] sm:$0x1] %v988
        %v990 = vld [vmem:[%s942 + $0x34] sm:$0x1]
        %v991 = vsel %vm971, 0, %v990
        %992 = vst [vmem:[%s942 + $0x34] sm:$0x1] %v991
        %v993 = vld [vmem:[%s942 + $0x3c] sm:$0x1]
        %v994 = vsel %vm971, 0, %v993
        %995 = vst [vmem:[%s942 + $0x3c] sm:$0x1] %v994
        %v996 = vpack.c.bf16 %v927, %v927
        %v997 = vpack.c.bf16 %v928, %v928
        %v998 = vpack.c.bf16 %v929, %v929
        %v999 = vpack.c.bf16 %v930, %v930
        %v1000 = vpack.c.bf16 %v931, %v931
        %v1001 = vpack.c.bf16 %v932, %v932
        %v1002 = vpack.c.bf16 %v933, %v933
        %v1003 = vpack.c.bf16 %v934, %v934
        %v1012 = vunpack.c.l.b16 %v996
        %v1013 = vunpack.c.l.b16 %v997
        %v1014 = vunpack.c.l.b16 %v998
        %v1015 = vunpack.c.l.b16 %v999
        %v1016 = vunpack.c.l.b16 %v1000
        %v1017 = vunpack.c.l.b16 %v1001
        %v1018 = vunpack.c.l.b16 %v1002
        %v1019 = vunpack.c.l.b16 %v1003
        %v1020 = vpack.c.b16 %v1012, %v1012
        %v1021 = vpack.c.b16 %v1013, %v1013
        %v1022 = vpack.c.b16 %v1014, %v1014
        %v1023 = vpack.c.b16 %v1015, %v1015
        %v1024 = vpack.c.b16 %v1016, %v1016
        %v1025 = vpack.c.b16 %v1017, %v1017
        %v1026 = vpack.c.b16 %v1018, %v1018
        %v1027 = vpack.c.b16 %v1019, %v1019
        %v1029 = vshrl.u32 %v1020, 16
        %v1031 = vrot.slane %v1029, 7
        %v1032 = vshll.u32 %v1020, 16
        %v1034 = vor.u32 %v1031, %v1032
        %v1035 = vrot.slane %v1031, 4
        %v1037 = vshrl.u32 %v1021, 16
        %v1039 = vrot.slane %v1037, 7
        %v1040 = vshll.u32 %v1021, 16
        %v1042 = vor.u32 %v1039, %v1040
        %v1043 = vrot.slane %v1039, 4
        %v1045 = vshrl.u32 %v1022, 16
        %v1047 = vrot.slane %v1045, 7
        %v1048 = vshll.u32 %v1022, 16
        %v1050 = vor.u32 %v1047, %v1048
        %v1051 = vrot.slane %v1047, 4
        %v1053 = vshrl.u32 %v1023, 16
        %v1055 = vrot.slane %v1053, 7
        %v1056 = vshll.u32 %v1023, 16
        %v1058 = vor.u32 %v1055, %v1056
        %v1059 = vrot.slane %v1055, 4
        %v1061 = vshrl.u32 %v1024, 16
        %v1063 = vrot.slane %v1061, 7
        %v1064 = vshll.u32 %v1024, 16
        %v1066 = vor.u32 %v1063, %v1064
        %v1067 = vrot.slane %v1063, 4
        %v1069 = vshrl.u32 %v1025, 16
        %v1071 = vrot.slane %v1069, 7
        %v1072 = vshll.u32 %v1025, 16
        %v1074 = vor.u32 %v1071, %v1072
        %v1075 = vrot.slane %v1071, 4
        %v1077 = vshrl.u32 %v1026, 16
        %v1079 = vrot.slane %v1077, 7
        %v1080 = vshll.u32 %v1026, 16
        %v1082 = vor.u32 %v1079, %v1080
        %v1083 = vrot.slane %v1079, 4
        %v1085 = vshrl.u32 %v1027, 16
        %v1087 = vrot.slane %v1085, 7
        %v1088 = vshll.u32 %v1027, 16
        %v1090 = vor.u32 %v1087, %v1088
        %v1091 = vrot.slane %v1087, 4
        %vm1108 = vcmask 125952
        %vm1109 = vmand %vm1108, %vm970
        %v1110 = vld [vmem:[%s942] sm:$0xf]
        %v1111 = vsel %vm1109, %v1034, %v1110
        %1112 = vst [vmem:[%s942] sm:$0xf] %v1111
        %v1113 = vld [vmem:[%s942 + $0x4] sm:$0x1]
        %v1114 = vsel %vm945, %v1035, %v1113
        %1115 = vst [vmem:[%s942 + $0x4] sm:$0x1] %v1114
        %v1116 = vld [vmem:[%s942 + $0x8] sm:$0xf]
        %v1117 = vsel %vm1109, %v1042, %v1116
        %1118 = vst [vmem:[%s942 + $0x8] sm:$0xf] %v1117
        %v1119 = vld [vmem:[%s942 + $0xc] sm:$0x1]
        %v1120 = vsel %vm945, %v1043, %v1119
        %1121 = vst [vmem:[%s942 + $0xc] sm:$0x1] %v1120
        %v1122 = vld [vmem:[%s942 + $0x10] sm:$0xf]
        %v1123 = vsel %vm1109, %v1050, %v1122
        %1124 = vst [vmem:[%s942 + $0x10] sm:$0xf] %v1123
        %v1125 = vld [vmem:[%s942 + $0x14] sm:$0x1]
        %v1126 = vsel %vm945, %v1051, %v1125
        %1127 = vst [vmem:[%s942 + $0x14] sm:$0x1] %v1126
        %v1128 = vld [vmem:[%s942 + $0x18] sm:$0xf]
        %v1129 = vsel %vm1109, %v1058, %v1128
        %1130 = vst [vmem:[%s942 + $0x18] sm:$0xf] %v1129
        %v1131 = vld [vmem:[%s942 + $0x1c] sm:$0x1]
        %v1132 = vsel %vm945, %v1059, %v1131
        %1133 = vst [vmem:[%s942 + $0x1c] sm:$0x1] %v1132
        %v1134 = vld [vmem:[%s942 + $0x20] sm:$0xf]
        %v1135 = vsel %vm1109, %v1066, %v1134
        %1136 = vst [vmem:[%s942 + $0x20] sm:$0xf] %v1135
        %v1137 = vld [vmem:[%s942 + $0x24] sm:$0x1]
        %v1138 = vsel %vm945, %v1067, %v1137
        %1139 = vst [vmem:[%s942 + $0x24] sm:$0x1] %v1138
        %v1140 = vld [vmem:[%s942 + $0x28] sm:$0xf]
        %v1141 = vsel %vm1109, %v1074, %v1140
        %1142 = vst [vmem:[%s942 + $0x28] sm:$0xf] %v1141
        %v1143 = vld [vmem:[%s942 + $0x2c] sm:$0x1]
        %v1144 = vsel %vm945, %v1075, %v1143
        %1145 = vst [vmem:[%s942 + $0x2c] sm:$0x1] %v1144
        %v1146 = vld [vmem:[%s942 + $0x30] sm:$0xf]
        %v1147 = vsel %vm1109, %v1082, %v1146
        %1148 = vst [vmem:[%s942 + $0x30] sm:$0xf] %v1147
        %v1149 = vld [vmem:[%s942 + $0x34] sm:$0x1]
        %v1150 = vsel %vm945, %v1083, %v1149
        %1151 = vst [vmem:[%s942 + $0x34] sm:$0x1] %v1150
        %v1152 = vld [vmem:[%s942 + $0x38] sm:$0xf]
        %v1153 = vsel %vm1109, %v1090, %v1152
        %1154 = vst [vmem:[%s942 + $0x38] sm:$0xf] %v1153
        %v1155 = vld [vmem:[%s942 + $0x3c] sm:$0x1]
        %v1156 = vsel %vm945, %v1091, %v1155
        %1157 = vst [vmem:[%s942 + $0x3c] sm:$0x1] %v1156
        %v1158 = vld [vmem:[#allocation2] sm:$0xf]
        %v1159 = vld [vmem:[#allocation2 + $0x8] sm:$0xf]
        %v1160 = vld [vmem:[#allocation2 + $0x10] sm:$0xf]
        %v1161 = vld [vmem:[#allocation2 + $0x18] sm:$0xf]
        %v1162 = vld [vmem:[#allocation2 + $0x20] sm:$0xf]
        %v1163 = vld [vmem:[#allocation2 + $0x28] sm:$0xf]
        %v1164 = vld [vmem:[#allocation2 + $0x30] sm:$0xf]
        %v1165 = vld [vmem:[#allocation2 + $0x38] sm:$0xf]
        %v1166 = vld [vmem:[#allocation2 + $0x4] sm:$0x1]
        %v1167 = vld [vmem:[#allocation2 + $0xc] sm:$0x1]
        %v1168 = vld [vmem:[#allocation2 + $0x14] sm:$0x1]
        %v1169 = vld [vmem:[#allocation2 + $0x1c] sm:$0x1]
        %v1170 = vld [vmem:[#allocation2 + $0x24] sm:$0x1]
        %v1171 = vld [vmem:[#allocation2 + $0x2c] sm:$0x1]
        %v1172 = vld [vmem:[#allocation2 + $0x34] sm:$0x1]
        %v1173 = vld [vmem:[#allocation2 + $0x3c] sm:$0x1]
        %v1175 = vshrl.u32 %v1158, 16
        %v1177 = vrot.slane %v1175, 4
        %v1178 = vshll.u32 %v1158, 16
        %v1180 = vrot.slane %v1178, 5
        %v1181 = vor.u32 %v1177, %v1180
        %v1182 = vrot.slane %v1181, 4
        %v1184 = vshll.u32 %v1166, 16
        %v1186 = vrot.slane %v1184, 5
        %v1187 = vsel %vm377, %v1182, %v1186
        %v1189 = vshrl.u32 %v1159, 16
        %v1191 = vrot.slane %v1189, 4
        %v1192 = vshll.u32 %v1159, 16
        %v1194 = vrot.slane %v1192, 5
        %v1195 = vor.u32 %v1191, %v1194
        %v1196 = vrot.slane %v1195, 4
        %v1198 = vshll.u32 %v1167, 16
        %v1200 = vrot.slane %v1198, 5
        %v1201 = vsel %vm377, %v1196, %v1200
        %v1203 = vshrl.u32 %v1160, 16
        %v1205 = vrot.slane %v1203, 4
        %v1206 = vshll.u32 %v1160, 16
        %v1208 = vrot.slane %v1206, 5
        %v1209 = vor.u32 %v1205, %v1208
        %v1210 = vrot.slane %v1209, 4
        %v1212 = vshll.u32 %v1168, 16
        %v1214 = vrot.slane %v1212, 5
        %v1215 = vsel %vm377, %v1210, %v1214
        %v1217 = vshrl.u32 %v1161, 16
        %v1219 = vrot.slane %v1217, 4
        %v1220 = vshll.u32 %v1161, 16
        %v1222 = vrot.slane %v1220, 5
        %v1223 = vor.u32 %v1219, %v1222
        %v1224 = vrot.slane %v1223, 4
        %v1226 = vshll.u32 %v1169, 16
        %v1228 = vrot.slane %v1226, 5
        %v1229 = vsel %vm377, %v1224, %v1228
        %v1231 = vshrl.u32 %v1162, 16
        %v1233 = vrot.slane %v1231, 4
        %v1234 = vshll.u32 %v1162, 16
        %v1236 = vrot.slane %v1234, 5
        %v1237 = vor.u32 %v1233, %v1236
        %v1238 = vrot.slane %v1237, 4
        %v1240 = vshll.u32 %v1170, 16
        %v1242 = vrot.slane %v1240, 5
        %v1243 = vsel %vm377, %v1238, %v1242
        %v1245 = vshrl.u32 %v1163, 16
        %v1247 = vrot.slane %v1245, 4
        %v1248 = vshll.u32 %v1163, 16
        %v1250 = vrot.slane %v1248, 5
        %v1251 = vor.u32 %v1247, %v1250
        %v1252 = vrot.slane %v1251, 4
        %v1254 = vshll.u32 %v1171, 16
        %v1256 = vrot.slane %v1254, 5
        %v1257 = vsel %vm377, %v1252, %v1256
        %v1259 = vshrl.u32 %v1164, 16
        %v1261 = vrot.slane %v1259, 4
        %v1262 = vshll.u32 %v1164, 16
        %v1264 = vrot.slane %v1262, 5
        %v1265 = vor.u32 %v1261, %v1264
        %v1266 = vrot.slane %v1265, 4
        %v1268 = vshll.u32 %v1172, 16
        %v1270 = vrot.slane %v1268, 5
        %v1271 = vsel %vm377, %v1266, %v1270
        %v1273 = vshrl.u32 %v1165, 16
        %v1275 = vrot.slane %v1273, 4
        %v1276 = vshll.u32 %v1165, 16
        %v1278 = vrot.slane %v1276, 5
        %v1279 = vor.u32 %v1275, %v1278
        %v1280 = vrot.slane %v1279, 4
        %v1282 = vshll.u32 %v1173, 16
        %v1284 = vrot.slane %v1282, 5
        %v1285 = vsel %vm377, %v1280, %v1284
        %v1286 = vld [vmem:[#allocation2] sm:$0xe]
        %v1287 = vld [vmem:[#allocation2 + $0x8] sm:$0xe]
        %v1288 = vld [vmem:[#allocation2 + $0x10] sm:$0xe]
        %v1289 = vld [vmem:[#allocation2 + $0x18] sm:$0xe]
        %v1290 = vld [vmem:[#allocation2 + $0x20] sm:$0xe]
        %v1291 = vld [vmem:[#allocation2 + $0x28] sm:$0xe]
        %v1292 = vld [vmem:[#allocation2 + $0x30] sm:$0xe]
        %v1293 = vld [vmem:[#allocation2 + $0x38] sm:$0xe]
        %vm1310 = vcmask 1042432
        %vm1311 = vcmask 1046532
        %vm1312 = vmor %vm1310, %vm1311
        %v1313 = vrot.slane %v1286, 5
        %v1314 = vrot.slane %v1313, 4
        %v1315 = vrot.slane %v1166, 5
        %v1316 = vsel %vm1312, %v1314, %v1315
        %v1317 = vrot.slane %v1287, 5
        %v1318 = vrot.slane %v1317, 4
        %v1319 = vrot.slane %v1167, 5
        %v1320 = vsel %vm1312, %v1318, %v1319
        %v1321 = vrot.slane %v1288, 5
        %v1322 = vrot.slane %v1321, 4
        %v1323 = vrot.slane %v1168, 5
        %v1324 = vsel %vm1312, %v1322, %v1323
        %v1325 = vrot.slane %v1289, 5
        %v1326 = vrot.slane %v1325, 4
        %v1327 = vrot.slane %v1169, 5
        %v1328 = vsel %vm1312, %v1326, %v1327
        %v1329 = vrot.slane %v1290, 5
        %v1330 = vrot.slane %v1329, 4
        %v1331 = vrot.slane %v1170, 5
        %v1332 = vsel %vm1312, %v1330, %v1331
        %v1333 = vrot.slane %v1291, 5
        %v1334 = vrot.slane %v1333, 4
        %v1335 = vrot.slane %v1171, 5
        %v1336 = vsel %vm1312, %v1334, %v1335
        %v1337 = vrot.slane %v1292, 5
        %v1338 = vrot.slane %v1337, 4
        %v1339 = vrot.slane %v1172, 5
        %v1340 = vsel %vm1312, %v1338, %v1339
        %v1341 = vrot.slane %v1293, 5
        %v1342 = vrot.slane %v1341, 4
        %v1343 = vrot.slane %v1173, 5
        %v1344 = vsel %vm1312, %v1342, %v1343
        %v1345 = vld [vmem:[%s942] sm:$0xf]
        %v1346 = vld [vmem:[%s942 + $0x8] sm:$0xf]
        %v1347 = vld [vmem:[%s942 + $0x10] sm:$0xf]
        %v1348 = vld [vmem:[%s942 + $0x18] sm:$0xf]
        %v1349 = vld [vmem:[%s942 + $0x20] sm:$0xf]
        %v1350 = vld [vmem:[%s942 + $0x28] sm:$0xf]
        %v1351 = vld [vmem:[%s942 + $0x30] sm:$0xf]
        %v1352 = vld [vmem:[%s942 + $0x38] sm:$0xf]
        %v1353 = vld [vmem:[%s942 + $0x4] sm:$0x1]
        %v1354 = vld [vmem:[%s942 + $0xc] sm:$0x1]
        %v1355 = vld [vmem:[%s942 + $0x14] sm:$0x1]
        %v1356 = vld [vmem:[%s942 + $0x1c] sm:$0x1]
        %v1357 = vld [vmem:[%s942 + $0x24] sm:$0x1]
        %v1358 = vld [vmem:[%s942 + $0x2c] sm:$0x1]
        %v1359 = vld [vmem:[%s942 + $0x34] sm:$0x1]
        %v1360 = vld [vmem:[%s942 + $0x3c] sm:$0x1]
        %v1362 = vshrl.u32 %v1345, 16
        %v1364 = vrot.slane %v1362, 4
        %v1365 = vshll.u32 %v1345, 16
        %v1367 = vrot.slane %v1365, 5
        %v1368 = vor.u32 %v1364, %v1367
        %v1369 = vrot.slane %v1368, 4
        %v1371 = vshll.u32 %v1353, 16
        %v1373 = vrot.slane %v1371, 5
        %v1374 = vsel %vm377, %v1369, %v1373
        %v1376 = vshrl.u32 %v1346, 16
        %v1378 = vrot.slane %v1376, 4
        %v1379 = vshll.u32 %v1346, 16
        %v1381 = vrot.slane %v1379, 5
        %v1382 = vor.u32 %v1378, %v1381
        %v1383 = vrot.slane %v1382, 4
        %v1385 = vshll.u32 %v1354, 16
        %v1387 = vrot.slane %v1385, 5
        %v1388 = vsel %vm377, %v1383, %v1387
        %v1390 = vshrl.u32 %v1347, 16
        %v1392 = vrot.slane %v1390, 4
        %v1393 = vshll.u32 %v1347, 16
        %v1395 = vrot.slane %v1393, 5
        %v1396 = vor.u32 %v1392, %v1395
        %v1397 = vrot.slane %v1396, 4
        %v1399 = vshll.u32 %v1355, 16
        %v1401 = vrot.slane %v1399, 5
        %v1402 = vsel %vm377, %v1397, %v1401
        %v1404 = vshrl.u32 %v1348, 16
        %v1406 = vrot.slane %v1404, 4
        %v1407 = vshll.u32 %v1348, 16
        %v1409 = vrot.slane %v1407, 5
        %v1410 = vor.u32 %v1406, %v1409
        %v1411 = vrot.slane %v1410, 4
        %v1413 = vshll.u32 %v1356, 16
        %v1415 = vrot.slane %v1413, 5
        %v1416 = vsel %vm377, %v1411, %v1415
        %v1418 = vshrl.u32 %v1349, 16
        %v1420 = vrot.slane %v1418, 4
        %v1421 = vshll.u32 %v1349, 16
        %v1423 = vrot.slane %v1421, 5
        %v1424 = vor.u32 %v1420, %v1423
        %v1425 = vrot.slane %v1424, 4
        %v1427 = vshll.u32 %v1357, 16
        %v1429 = vrot.slane %v1427, 5
        %v1430 = vsel %vm377, %v1425, %v1429
        %v1432 = vshrl.u32 %v1350, 16
        %v1434 = vrot.slane %v1432, 4
        %v1435 = vshll.u32 %v1350, 16
        %v1437 = vrot.slane %v1435, 5
        %v1438 = vor.u32 %v1434, %v1437
        %v1439 = vrot.slane %v1438, 4
        %v1441 = vshll.u32 %v1358, 16
        %v1443 = vrot.slane %v1441, 5
        %v1444 = vsel %vm377, %v1439, %v1443
        %v1446 = vshrl.u32 %v1351, 16
        %v1448 = vrot.slane %v1446, 4
        %v1449 = vshll.u32 %v1351, 16
        %v1451 = vrot.slane %v1449, 5
        %v1452 = vor.u32 %v1448, %v1451
        %v1453 = vrot.slane %v1452, 4
        %v1455 = vshll.u32 %v1359, 16
        %v1457 = vrot.slane %v1455, 5
        %v1458 = vsel %vm377, %v1453, %v1457
        %v1460 = vshrl.u32 %v1352, 16
        %v1462 = vrot.slane %v1460, 4
        %v1463 = vshll.u32 %v1352, 16
        %v1465 = vrot.slane %v1463, 5
        %v1466 = vor.u32 %v1462, %v1465
        %v1467 = vrot.slane %v1466, 4
        %v1469 = vshll.u32 %v1360, 16
        %v1471 = vrot.slane %v1469, 5
        %v1472 = vsel %vm377, %v1467, %v1471
        %v1473 = vld [vmem:[%s942] sm:$0xe]
        %v1474 = vld [vmem:[%s942 + $0x8] sm:$0xe]
        %v1475 = vld [vmem:[%s942 + $0x10] sm:$0xe]
        %v1476 = vld [vmem:[%s942 + $0x18] sm:$0xe]
        %v1477 = vld [vmem:[%s942 + $0x20] sm:$0xe]
        %v1478 = vld [vmem:[%s942 + $0x28] sm:$0xe]
        %v1479 = vld [vmem:[%s942 + $0x30] sm:$0xe]
        %v1480 = vld [vmem:[%s942 + $0x38] sm:$0xe]
        %v1497 = vrot.slane %v1473, 5
        %v1498 = vrot.slane %v1497, 4
        %v1499 = vrot.slane %v1353, 5
        %v1500 = vsel %vm1312, %v1498, %v1499
        %v1501 = vrot.slane %v1474, 5
        %v1502 = vrot.slane %v1501, 4
        %v1503 = vrot.slane %v1354, 5
        %v1504 = vsel %vm1312, %v1502, %v1503
        %v1505 = vrot.slane %v1475, 5
        %v1506 = vrot.slane %v1505, 4
        %v1507 = vrot.slane %v1355, 5
        %v1508 = vsel %vm1312, %v1506, %v1507
        %v1509 = vrot.slane %v1476, 5
        %v1510 = vrot.slane %v1509, 4
        %v1511 = vrot.slane %v1356, 5
        %v1512 = vsel %vm1312, %v1510, %v1511
        %v1513 = vrot.slane %v1477, 5
        %v1514 = vrot.slane %v1513, 4
        %v1515 = vrot.slane %v1357, 5
        %v1516 = vsel %vm1312, %v1514, %v1515
        %v1517 = vrot.slane %v1478, 5
        %v1518 = vrot.slane %v1517, 4
        %v1519 = vrot.slane %v1358, 5
        %v1520 = vsel %vm1312, %v1518, %v1519
        %v1521 = vrot.slane %v1479, 5
        %v1522 = vrot.slane %v1521, 4
        %v1523 = vrot.slane %v1359, 5
        %v1524 = vsel %vm1312, %v1522, %v1523
        %v1525 = vrot.slane %v1480, 5
        %v1526 = vrot.slane %v1525, 4
        %v1527 = vrot.slane %v1360, 5
        %v1528 = vsel %vm1312, %v1526, %v1527
        %s1529 = scalar_lea.vmem [#allocation2], 16
        %v1530 = vld [vmem:[%s1529] sm:$0xf]
        %v1531 = vld [vmem:[%s1529 + $0x8] sm:$0xf]
        %v1532 = vld [vmem:[%s1529 + $0x10] sm:$0xf]
        %v1533 = vld [vmem:[%s1529 + $0x18] sm:$0xf]
        %v1534 = vld [vmem:[%s1529 + $0x20] sm:$0xf]
        %v1535 = vld [vmem:[%s1529 + $0x28] sm:$0xf]
        %v1536 = vld [vmem:[%s1529 + $0x30] sm:$0xf]
        %v1537 = vld [vmem:[%s1529 + $0x38] sm:$0xf]
        %v1538 = vld [vmem:[%s1529 + $0x4] sm:$0x1]
        %v1539 = vld [vmem:[%s1529 + $0xc] sm:$0x1]
        %v1540 = vld [vmem:[%s1529 + $0x14] sm:$0x1]
        %v1541 = vld [vmem:[%s1529 + $0x1c] sm:$0x1]
        %v1542 = vld [vmem:[%s1529 + $0x24] sm:$0x1]
        %v1543 = vld [vmem:[%s1529 + $0x2c] sm:$0x1]
        %v1544 = vld [vmem:[%s1529 + $0x34] sm:$0x1]
        %v1545 = vld [vmem:[%s1529 + $0x3c] sm:$0x1]
        %v1547 = vshrl.u32 %v1530, 16
        %v1549 = vrot.slane %v1547, 4
        %v1550 = vshll.u32 %v1530, 16
        %v1552 = vrot.slane %v1550, 5
        %v1553 = vor.u32 %v1549, %v1552
        %v1554 = vrot.slane %v1553, 4
        %v1556 = vshll.u32 %v1538, 16
        %v1558 = vrot.slane %v1556, 5
        %v1559 = vsel %vm377, %v1554, %v1558
        %v1561 = vshrl.u32 %v1531, 16
        %v1563 = vrot.slane %v1561, 4
        %v1564 = vshll.u32 %v1531, 16
        %v1566 = vrot.slane %v1564, 5
        %v1567 = vor.u32 %v1563, %v1566
        %v1568 = vrot.slane %v1567, 4
        %v1570 = vshll.u32 %v1539, 16
        %v1572 = vrot.slane %v1570, 5
        %v1573 = vsel %vm377, %v1568, %v1572
        %v1575 = vshrl.u32 %v1532, 16
        %v1577 = vrot.slane %v1575, 4
        %v1578 = vshll.u32 %v1532, 16
        %v1580 = vrot.slane %v1578, 5
        %v1581 = vor.u32 %v1577, %v1580
        %v1582 = vrot.slane %v1581, 4
        %v1584 = vshll.u32 %v1540, 16
        %v1586 = vrot.slane %v1584, 5
        %v1587 = vsel %vm377, %v1582, %v1586
        %v1589 = vshrl.u32 %v1533, 16
        %v1591 = vrot.slane %v1589, 4
        %v1592 = vshll.u32 %v1533, 16
        %v1594 = vrot.slane %v1592, 5
        %v1595 = vor.u32 %v1591, %v1594
        %v1596 = vrot.slane %v1595, 4
        %v1598 = vshll.u32 %v1541, 16
        %v1600 = vrot.slane %v1598, 5
        %v1601 = vsel %vm377, %v1596, %v1600
        %v1603 = vshrl.u32 %v1534, 16
        %v1605 = vrot.slane %v1603, 4
        %v1606 = vshll.u32 %v1534, 16
        %v1608 = vrot.slane %v1606, 5
        %v1609 = vor.u32 %v1605, %v1608
        %v1610 = vrot.slane %v1609, 4
        %v1612 = vshll.u32 %v1542, 16
        %v1614 = vrot.slane %v1612, 5
        %v1615 = vsel %vm377, %v1610, %v1614
        %v1617 = vshrl.u32 %v1535, 16
        %v1619 = vrot.slane %v1617, 4
        %v1620 = vshll.u32 %v1535, 16
        %v1622 = vrot.slane %v1620, 5
        %v1623 = vor.u32 %v1619, %v1622
        %v1624 = vrot.slane %v1623, 4
        %v1626 = vshll.u32 %v1543, 16
        %v1628 = vrot.slane %v1626, 5
        %v1629 = vsel %vm377, %v1624, %v1628
        %v1631 = vshrl.u32 %v1536, 16
        %v1633 = vrot.slane %v1631, 4
        %v1634 = vshll.u32 %v1536, 16
        %v1636 = vrot.slane %v1634, 5
        %v1637 = vor.u32 %v1633, %v1636
        %v1638 = vrot.slane %v1637, 4
        %v1640 = vshll.u32 %v1544, 16
        %v1642 = vrot.slane %v1640, 5
        %v1643 = vsel %vm377, %v1638, %v1642
        %v1645 = vshrl.u32 %v1537, 16
        %v1647 = vrot.slane %v1645, 4
        %v1648 = vshll.u32 %v1537, 16
        %v1650 = vrot.slane %v1648, 5
        %v1651 = vor.u32 %v1647, %v1650
        %v1652 = vrot.slane %v1651, 4
        %v1654 = vshll.u32 %v1545, 16
        %v1656 = vrot.slane %v1654, 5
        %v1657 = vsel %vm377, %v1652, %v1656
        %v1658 = vld [vmem:[%s1529] sm:$0xe]
        %v1659 = vld [vmem:[%s1529 + $0x8] sm:$0xe]
        %v1660 = vld [vmem:[%s1529 + $0x10] sm:$0xe]
        %v1661 = vld [vmem:[%s1529 + $0x18] sm:$0xe]
        %v1662 = vld [vmem:[%s1529 + $0x20] sm:$0xe]
        %v1663 = vld [vmem:[%s1529 + $0x28] sm:$0xe]
        %v1664 = vld [vmem:[%s1529 + $0x30] sm:$0xe]
        %v1665 = vld [vmem:[%s1529 + $0x38] sm:$0xe]
        %v1682 = vrot.slane %v1658, 5
        %v1683 = vrot.slane %v1682, 4
        %v1684 = vrot.slane %v1538, 5
        %v1685 = vsel %vm1312, %v1683, %v1684
        %v1686 = vrot.slane %v1659, 5
        %v1687 = vrot.slane %v1686, 4
        %v1688 = vrot.slane %v1539, 5
        %v1689 = vsel %vm1312, %v1687, %v1688
        %v1690 = vrot.slane %v1660, 5
        %v1691 = vrot.slane %v1690, 4
        %v1692 = vrot.slane %v1540, 5
        %v1693 = vsel %vm1312, %v1691, %v1692
        %v1694 = vrot.slane %v1661, 5
        %v1695 = vrot.slane %v1694, 4
        %v1696 = vrot.slane %v1541, 5
        %v1697 = vsel %vm1312, %v1695, %v1696
        %v1698 = vrot.slane %v1662, 5
        %v1699 = vrot.slane %v1698, 4
        %v1700 = vrot.slane %v1542, 5
        %v1701 = vsel %vm1312, %v1699, %v1700
        %v1702 = vrot.slane %v1663, 5
        %v1703 = vrot.slane %v1702, 4
        %v1704 = vrot.slane %v1543, 5
        %v1705 = vsel %vm1312, %v1703, %v1704
        %v1706 = vrot.slane %v1664, 5
        %v1707 = vrot.slane %v1706, 4
        %v1708 = vrot.slane %v1544, 5
        %v1709 = vsel %vm1312, %v1707, %v1708
        %v1710 = vrot.slane %v1665, 5
        %v1711 = vrot.slane %v1710, 4
        %v1712 = vrot.slane %v1545, 5
        %v1713 = vsel %vm1312, %v1711, %v1712
        %v1722 = vunpack.c.l.b16 %v1158
        %v1723 = vunpack.c.l.b16 %v1159
        %v1724 = vunpack.c.l.b16 %v1160
        %v1725 = vunpack.c.l.b16 %v1161
        %v1726 = vunpack.c.l.b16 %v1162
        %v1727 = vunpack.c.l.b16 %v1163
        %v1728 = vunpack.c.l.b16 %v1164
        %v1729 = vunpack.c.l.b16 %v1165
        %v1730 = vpack.c.b16 %v1723, %v1722
        %v1731 = vpack.c.b16 %v1725, %v1724
        %v1732 = vpack.c.b16 %v1727, %v1726
        %v1733 = vpack.c.b16 %v1729, %v1728
        %v1734 = vunpack.c.l.b16 %v1187
        %v1735 = vunpack.c.l.b16 %v1201
        %v1736 = vunpack.c.l.b16 %v1215
        %v1737 = vunpack.c.l.b16 %v1229
        %v1738 = vunpack.c.l.b16 %v1243
        %v1739 = vunpack.c.l.b16 %v1257
        %v1740 = vunpack.c.l.b16 %v1271
        %v1741 = vunpack.c.l.b16 %v1285
        %v1742 = vpack.c.b16 %v1735, %v1734
        %v1743 = vpack.c.b16 %v1737, %v1736
        %v1744 = vpack.c.b16 %v1739, %v1738
        %v1745 = vpack.c.b16 %v1741, %v1740
        %1746 = vrot.lane.b32.xlu0 %v1742, 16
        %v1747 = vpop.permute.xlu0 %1746
        %1748 = vrot.lane.b32.xlu0 %v1743, 16
        %v1749 = vpop.permute.xlu0 %1748
        %1750 = vrot.lane.b32.xlu0 %v1744, 16
        %v1751 = vpop.permute.xlu0 %1750
        %1752 = vrot.lane.b32.xlu0 %v1745, 16
        %v1753 = vpop.permute.xlu0 %1752
        %v1754 = vunpack.c.l.b16 %v1316
        %v1755 = vunpack.c.l.b16 %v1320
        %v1756 = vunpack.c.l.b16 %v1324
        %v1757 = vunpack.c.l.b16 %v1328
        %v1758 = vunpack.c.l.b16 %v1332
        %v1759 = vunpack.c.l.b16 %v1336
        %v1760 = vunpack.c.l.b16 %v1340
        %v1761 = vunpack.c.l.b16 %v1344
        %v1762 = vpack.c.b16 %v1755, %v1754
        %v1763 = vpack.c.b16 %v1757, %v1756
        %v1764 = vpack.c.b16 %v1759, %v1758
        %v1765 = vpack.c.b16 %v1761, %v1760
        %1766 = vrot.lane.b32.xlu0 %v1762, 32
        %v1767 = vpop.permute.xlu0 %1766
        %1768 = vrot.lane.b32.xlu0 %v1763, 32
        %v1769 = vpop.permute.xlu0 %1768
        %1770 = vrot.lane.b32.xlu0 %v1764, 32
        %v1771 = vpop.permute.xlu0 %1770
        %1772 = vrot.lane.b32.xlu0 %v1765, 32
        %v1773 = vpop.permute.xlu0 %1772
        %v1782 = vunpack.c.l.b16 %v1345
        %v1783 = vunpack.c.l.b16 %v1346
        %v1784 = vunpack.c.l.b16 %v1347
        %v1785 = vunpack.c.l.b16 %v1348
        %v1786 = vunpack.c.l.b16 %v1349
        %v1787 = vunpack.c.l.b16 %v1350
        %v1788 = vunpack.c.l.b16 %v1351
        %v1789 = vunpack.c.l.b16 %v1352
        %v1790 = vpack.c.b16 %v1783, %v1782
        %v1791 = vpack.c.b16 %v1785, %v1784
        %v1792 = vpack.c.b16 %v1787, %v1786
        %v1793 = vpack.c.b16 %v1789, %v1788
        %1794 = vrot.lane.b32.xlu0 %v1790, 48
        %v1795 = vpop.permute.xlu0 %1794
        %1796 = vrot.lane.b32.xlu0 %v1791, 48
        %v1797 = vpop.permute.xlu0 %1796
        %1798 = vrot.lane.b32.xlu0 %v1792, 48
        %v1799 = vpop.permute.xlu0 %1798
        %1800 = vrot.lane.b32.xlu0 %v1793, 48
        %v1801 = vpop.permute.xlu0 %1800
        %v1802 = vunpack.c.l.b16 %v1374
        %v1803 = vunpack.c.l.b16 %v1388
        %v1804 = vunpack.c.l.b16 %v1402
        %v1805 = vunpack.c.l.b16 %v1416
        %v1806 = vunpack.c.l.b16 %v1430
        %v1807 = vunpack.c.l.b16 %v1444
        %v1808 = vunpack.c.l.b16 %v1458
        %v1809 = vunpack.c.l.b16 %v1472
        %v1810 = vpack.c.b16 %v1803, %v1802
        %v1811 = vpack.c.b16 %v1805, %v1804
        %v1812 = vpack.c.b16 %v1807, %v1806
        %v1813 = vpack.c.b16 %v1809, %v1808
        %1814 = vrot.lane.b32.xlu0 %v1810, 64
        %v1815 = vpop.permute.xlu0 %1814
        %1816 = vrot.lane.b32.xlu0 %v1811, 64
        %v1817 = vpop.permute.xlu0 %1816
        %1818 = vrot.lane.b32.xlu0 %v1812, 64
        %v1819 = vpop.permute.xlu0 %1818
        %1820 = vrot.lane.b32.xlu0 %v1813, 64
        %v1821 = vpop.permute.xlu0 %1820
        %v1822 = vunpack.c.l.b16 %v1500
        %v1823 = vunpack.c.l.b16 %v1504
        %v1824 = vunpack.c.l.b16 %v1508
        %v1825 = vunpack.c.l.b16 %v1512
        %v1826 = vunpack.c.l.b16 %v1516
        %v1827 = vunpack.c.l.b16 %v1520
        %v1828 = vunpack.c.l.b16 %v1524
        %v1829 = vunpack.c.l.b16 %v1528
        %v1830 = vpack.c.b16 %v1823, %v1822
        %v1831 = vpack.c.b16 %v1825, %v1824
        %v1832 = vpack.c.b16 %v1827, %v1826
        %v1833 = vpack.c.b16 %v1829, %v1828
        %1834 = vrot.lane.b32.xlu0 %v1830, 80
        %v1835 = vpop.permute.xlu0 %1834
        %1836 = vrot.lane.b32.xlu0 %v1831, 80
        %v1837 = vpop.permute.xlu0 %1836
        %1838 = vrot.lane.b32.xlu0 %v1832, 80
        %v1839 = vpop.permute.xlu0 %1838
        %1840 = vrot.lane.b32.xlu0 %v1833, 80
        %v1841 = vpop.permute.xlu0 %1840
        %v1850 = vunpack.c.l.b16 %v1530
        %v1851 = vunpack.c.l.b16 %v1531
        %v1852 = vunpack.c.l.b16 %v1532
        %v1853 = vunpack.c.l.b16 %v1533
        %v1854 = vunpack.c.l.b16 %v1534
        %v1855 = vunpack.c.l.b16 %v1535
        %v1856 = vunpack.c.l.b16 %v1536
        %v1857 = vunpack.c.l.b16 %v1537
        %v1858 = vpack.c.b16 %v1851, %v1850
        %v1859 = vpack.c.b16 %v1853, %v1852
        %v1860 = vpack.c.b16 %v1855, %v1854
        %v1861 = vpack.c.b16 %v1857, %v1856
        %1862 = vrot.lane.b32.xlu0 %v1858, 96
        %v1863 = vpop.permute.xlu0 %1862
        %1864 = vrot.lane.b32.xlu0 %v1859, 96
        %v1865 = vpop.permute.xlu0 %1864
        %1866 = vrot.lane.b32.xlu0 %v1860, 96
        %v1867 = vpop.permute.xlu0 %1866
        %1868 = vrot.lane.b32.xlu0 %v1861, 96
        %v1869 = vpop.permute.xlu0 %1868
        %v1870 = vunpack.c.l.b16 %v1559
        %v1871 = vunpack.c.l.b16 %v1573
        %v1872 = vunpack.c.l.b16 %v1587
        %v1873 = vunpack.c.l.b16 %v1601
        %v1874 = vunpack.c.l.b16 %v1615
        %v1875 = vunpack.c.l.b16 %v1629
        %v1876 = vunpack.c.l.b16 %v1643
        %v1877 = vunpack.c.l.b16 %v1657
        %v1878 = vpack.c.b16 %v1871, %v1870
        %v1879 = vpack.c.b16 %v1873, %v1872
        %v1880 = vpack.c.b16 %v1875, %v1874
        %v1881 = vpack.c.b16 %v1877, %v1876
        %1882 = vrot.lane.b32.xlu0 %v1878, 112
        %v1883 = vpop.permute.xlu0 %1882
        %1884 = vrot.lane.b32.xlu0 %v1879, 112
        %v1885 = vpop.permute.xlu0 %1884
        %1886 = vrot.lane.b32.xlu0 %v1880, 112
        %v1887 = vpop.permute.xlu0 %1886
        %1888 = vrot.lane.b32.xlu0 %v1881, 112
        %v1889 = vpop.permute.xlu0 %1888
        %v1890 = vunpack.c.l.b16 %v1685
        %v1891 = vunpack.c.l.b16 %v1689
        %v1892 = vunpack.c.l.b16 %v1693
        %v1893 = vunpack.c.l.b16 %v1697
        %v1894 = vunpack.c.l.b16 %v1701
        %v1895 = vunpack.c.l.b16 %v1705
        %v1896 = vunpack.c.l.b16 %v1709
        %v1897 = vunpack.c.l.b16 %v1713
        %v1898 = vpack.c.b16 %v1891, %v1890
        %v1899 = vpack.c.b16 %v1893, %v1892
        %v1900 = vpack.c.b16 %v1895, %v1894
        %v1901 = vpack.c.b16 %v1897, %v1896
        %v1904 = vsel %vm728, %v1730, %v1747
        %v1907 = vsel %vm728, %v1731, %v1749
        %v1910 = vsel %vm728, %v1732, %v1751
        %v1913 = vsel %vm728, %v1733, %v1753
        %v1915 = vsel %vm746, %v1904, %v1767
        %v1917 = vsel %vm746, %v1907, %v1769
        %v1919 = vsel %vm746, %v1910, %v1771
        %v1921 = vsel %vm746, %v1913, %v1773
        %v1923 = vsel %vm760, %v1915, %v1795
        %v1925 = vsel %vm760, %v1917, %v1797
        %v1927 = vsel %vm760, %v1919, %v1799
        %v1929 = vsel %vm760, %v1921, %v1801
        %v1931 = vsel %vm774, %v1923, %v1815
        %v1933 = vsel %vm774, %v1925, %v1817
        %v1935 = vsel %vm774, %v1927, %v1819
        %v1937 = vsel %vm774, %v1929, %v1821
        %vm1938 = vcmask 654336
        %v1940 = vsel %vm1938, %v1931, %v1835
        %v1942 = vsel %vm1938, %v1933, %v1837
        %v1944 = vsel %vm1938, %v1935, %v1839
        %v1946 = vsel %vm1938, %v1937, %v1841
        %vm1947 = vcmask 785408
        %v1949 = vsel %vm1947, %v1940, %v1863
        %v1951 = vsel %vm1947, %v1942, %v1865
        %v1953 = vsel %vm1947, %v1944, %v1867
        %v1955 = vsel %vm1947, %v1946, %v1869
        %vm1956 = vcmask 916480
        %v1958 = vsel %vm1956, %v1949, %v1883
        %v1961 = vsel %vm1956, %v1951, %v1885
        %v1964 = vsel %vm1956, %v1953, %v1887
        %v1967 = vsel %vm1956, %v1955, %v1889
        %v1969 = vld [vmem:[%s4] sm:$0xf]
        %v1970 = vld [vmem:[%s4 + $0x4] sm:$0xf]
        %v1971 = vld [vmem:[%s4 + $0x8] sm:$0xf]
        %v1972 = vld [vmem:[%s4 + $0xc] sm:$0xf]
        %v1973 = vld [vmem:[%s4 + $0x10] sm:$0xf]
        %v1974 = vld [vmem:[%s4 + $0x14] sm:$0xf]
        %v1975 = vld [vmem:[%s4 + $0x18] sm:$0xf]
        %v1976 = vld [vmem:[%s4 + $0x1c] sm:$0xf]
        %v1977 = vld [vmem:[%s4 + $0x20] sm:$0xf]
        %v1978 = vld [vmem:[%s4 + $0x24] sm:$0xf]
        %v1979 = vld [vmem:[%s4 + $0x28] sm:$0xf]
        %v1980 = vld [vmem:[%s4 + $0x2c] sm:$0xf]
        %v1981 = vld [vmem:[%s4 + $0x30] sm:$0xf]
        %v1982 = vld [vmem:[%s4 + $0x34] sm:$0xf]
        %v1983 = vld [vmem:[%s4 + $0x38] sm:$0xf]
        %v1984 = vld [vmem:[%s4 + $0x3c] sm:$0xf]
        %v1985 = vld [vmem:[%s4 + $0x40] sm:$0xf]
        %v1986 = vld [vmem:[%s4 + $0x44] sm:$0xf]
        %v2005 = vunpack.c.l.b16 %v1969
        %v2006 = vunpack.c.l.b16 %v1970
        %v2007 = vunpack.c.l.b16 %v1971
        %v2008 = vunpack.c.l.b16 %v1972
        %v2009 = vunpack.c.l.b16 %v1973
        %v2010 = vunpack.c.l.b16 %v1974
        %v2011 = vunpack.c.l.b16 %v1975
        %v2012 = vunpack.c.l.b16 %v1976
        %v2013 = vunpack.c.l.b16 %v1977
        %v2014 = vunpack.c.l.b16 %v1978
        %v2015 = vunpack.c.l.b16 %v1979
        %v2016 = vunpack.c.l.b16 %v1980
        %v2017 = vunpack.c.l.b16 %v1981
        %v2018 = vunpack.c.l.b16 %v1982
        %v2019 = vunpack.c.l.b16 %v1983
        %v2020 = vunpack.c.l.b16 %v1984
        %v2021 = vunpack.c.l.b16 %v1985
        %v2022 = vunpack.c.l.b16 %v1986
        %v2023 = vpack.c.b16 %v2006, %v2005
        %v2024 = vpack.c.b16 %v2008, %v2007
        %v2025 = vpack.c.b16 %v2010, %v2009
        %v2026 = vpack.c.b16 %v2012, %v2011
        %v2027 = vpack.c.b16 %v2014, %v2013
        %v2028 = vpack.c.b16 %v2016, %v2015
        %v2029 = vpack.c.b16 %v2018, %v2017
        %v2030 = vpack.c.b16 %v2020, %v2019
        %v2031 = vpack.c.b16 %v2022, %v2021
        %v2042 = vsel %vm728, %v1898, 0
        %v2045 = vsel %vm728, %v1899, 0
        %v2048 = vsel %vm728, %v1900, 0
        %v2051 = vsel %vm728, %v1901, 0
        %2053 = vmatprep.subr.bf16.mxu0 0
        %2054 = vmatpush1.bf16.msra.mxu0 %v2030
        %2055 = vmatprep.subr.bf16.mxu0 0
        %2056 = vmatpush1.bf16.msra.mxu0 %v2029
        %2057 = vmatprep.subr.bf16.mxu0 0
        %2058 = vmatpush1.bf16.msra.mxu0 %v2028
        %2059 = vmatprep.subr.bf16.mxu0 0
        %2060 = vmatpush1.bf16.msra.mxu0 %v2027
        %2061 = vmatprep.subr.bf16.mxu0 0
        %2062 = vmatpush1.bf16.msra.mxu0 %v2026
        %2063 = vmatprep.subr.bf16.mxu0 0
        %2064 = vmatpush1.bf16.msra.mxu0 %v2025
        %2065 = vmatprep.subr.bf16.mxu0 0
        %2066 = vmatpush1.bf16.msra.mxu0 %v2024
        %2067 = vmatprep.subr.bf16.mxu0 0
        %2068 = vmatpush1.bf16.msra.mxu0 %v2023
        %2069 = vmatprep.subr.bf16.mxu0 0
        %2070 = vmatpush2.bf16.msra.mxu0 0
        %2071 = vmatprep.subr.bf16.mxu0 0
        %2072 = vmatpush2.bf16.msra.mxu0 0
        %2073 = vmatprep.subr.bf16.mxu0 0
        %2074 = vmatpush2.bf16.msra.mxu0 0
        %2075 = vmatprep.subr.bf16.mxu0 0
        %2076 = vmatpush2.bf16.msra.mxu0 0
        %2077 = vmatprep.subr.bf16.mxu0 0
        %2078 = vmatpush2.bf16.msra.mxu0 0
        %2079 = vmatprep.subr.bf16.mxu0 0
        %2080 = vmatpush2.bf16.msra.mxu0 0
        %2081 = vmatprep.subr.bf16.mxu0 0
        %2082 = vmatpush2.bf16.msra.mxu0 0
        %2083 = vmatprep.subr.bf16.mxu0 0
        %2084 = vmatpush2.bf16.msra.mxu0 %v2031
        %2085 = vmatprep.mubr.bf16.mxu0 %v2042
        %2086 = vmatmul.mubr.bf16.gmra.mxu0 %v1958
        %v2087 = vpop.f32.mrf.mxu0
        %v2088 = vadd.f32 0.0, %v2087
        %v2089 = vpop.f32.mrf.mxu0
        %v2090 = vpop.f32.mrf.mxu0
        %v2091 = vadd.f32 0.0, %v2090
        %v2092 = vpop.f32.mrf.mxu0
        %2093 = vmatprep.mubr.bf16.mxu0 %v2045
        %2094 = vmatmul.mubr.bf16.gmra.mxu0 %v1961
        %v2095 = vpop.f32.mrf.mxu0
        %v2096 = vadd.f32 0.0, %v2095
        %v2097 = vpop.f32.mrf.mxu0
        %v2098 = vpop.f32.mrf.mxu0
        %v2099 = vadd.f32 0.0, %v2098
        %v2100 = vpop.f32.mrf.mxu0
        %2101 = vmatprep.mubr.bf16.mxu0 %v2048
        %2102 = vmatmul.mubr.bf16.gmra.mxu0 %v1964
        %v2103 = vpop.f32.mrf.mxu0
        %v2104 = vadd.f32 0.0, %v2103
        %v2105 = vpop.f32.mrf.mxu0
        %v2106 = vpop.f32.mrf.mxu0
        %v2107 = vadd.f32 0.0, %v2106
        %v2108 = vpop.f32.mrf.mxu0
        %2109 = vmatprep.mubr.bf16.mxu0 %v2051
        %2110 = vmatmul.mubr.bf16.gmra.mxu0 %v1967
        %v2111 = vpop.f32.mrf.mxu0
        %v2112 = vadd.f32 0.0, %v2111
        %v2113 = vpop.f32.mrf.mxu0
        %v2114 = vpop.f32.mrf.mxu0
        %v2115 = vadd.f32 0.0, %v2114
        %v2116 = vpop.f32.mrf.mxu0
        %2117 = vdwg.mxu0
        %v2118 = vld [vmem:[%s5] sm:$0x1]
        %v2120 = vlaneseq
        %v2121 = vshrl.u32 %v2120, 7
        %v2122 = vsub.s32 0, %v2121
        %v2123 = vrot.slane %v2118, %v2122
        %v2125 = vmul.f32 %v2088, %v2123
        %v2126 = vmul.f32 %v2091, %v2123
        %v2127 = vmul.f32 %v2096, %v2123
        %v2128 = vmul.f32 %v2099, %v2123
        %v2129 = vmul.f32 %v2104, %v2123
        %v2130 = vmul.f32 %v2107, %v2123
        %v2131 = vmul.f32 %v2112, %v2123
        %v2132 = vmul.f32 %v2115, %v2123
        %v2133 = vld [vmem:[%s6] sm:$0x1]
        %v2135 = vlaneseq
        %v2136 = vshrl.u32 %v2135, 7
        %v2137 = vsub.s32 0, %v2136
        %v2138 = vrot.slane %v2133, %v2137
        %v2140 = vadd.f32 %v2125, %v2138
        %v2141 = vadd.f32 %v2126, %v2138
        %v2142 = vadd.f32 %v2127, %v2138
        %v2143 = vadd.f32 %v2128, %v2138
        %v2144 = vadd.f32 %v2129, %v2138
        %v2145 = vadd.f32 %v2130, %v2138
        %v2146 = vadd.f32 %v2131, %v2138
        %v2147 = vadd.f32 %v2132, %v2138
        %v2148 = vld [vmem:[%s357] sm:$0xf]
        %v2149 = vld [vmem:[%s357 + $0x8] sm:$0xf]
        %v2150 = vld [vmem:[%s357 + $0x10] sm:$0xf]
        %v2151 = vld [vmem:[%s357 + $0x18] sm:$0xf]
        %v2152 = vld [vmem:[%s357 + $0x20] sm:$0xf]
        %v2153 = vld [vmem:[%s357 + $0x28] sm:$0xf]
        %v2154 = vld [vmem:[%s357 + $0x30] sm:$0xf]
        %v2155 = vld [vmem:[%s357 + $0x38] sm:$0xf]
        %v2156 = vld [vmem:[%s7] sm:$0xf]
        %v2165 = vunpack.c.l.b16 %v2148
        %v2166 = vunpack.c.l.b16 %v2149
        %v2167 = vunpack.c.l.b16 %v2150
        %v2168 = vunpack.c.l.b16 %v2151
        %v2169 = vunpack.c.l.b16 %v2152
        %v2170 = vunpack.c.l.b16 %v2153
        %v2171 = vunpack.c.l.b16 %v2154
        %v2172 = vunpack.c.l.b16 %v2155
        %v2173 = vpack.c.b16 %v2166, %v2165
        %v2174 = vpack.c.b16 %v2168, %v2167
        %v2175 = vpack.c.b16 %v2170, %v2169
        %v2176 = vpack.c.b16 %v2172, %v2171
        %2177 = vrot.lane.b32.xlu0 %v2173, 104
        %v2178 = vpop.permute.xlu0 %2177
        %2179 = vrot.lane.b32.xlu0 %v2174, 104
        %v2180 = vpop.permute.xlu0 %2179
        %2181 = vrot.lane.b32.xlu0 %v2175, 104
        %v2182 = vpop.permute.xlu0 %2181
        %2183 = vrot.lane.b32.xlu0 %v2176, 104
        %v2184 = vpop.permute.xlu0 %2183
        %v2186 = vsel %vm723, %v2178, 0
        %v2189 = vsel %vm723, %v2180, 0
        %v2192 = vsel %vm723, %v2182, 0
        %v2195 = vsel %vm723, %v2184, 0
        %v2198 = vsel %vm828, %v2156, 0
        %2200 = vmatprep.subr.bf16.mxu0 0
        %2201 = vmatpush1.bf16.msra.mxu0 0
        %2202 = vmatprep.subr.bf16.mxu0 0
        %2203 = vmatpush1.bf16.msra.mxu0 0
        %2204 = vmatprep.subr.bf16.mxu0 0
        %2205 = vmatpush1.bf16.msra.mxu0 0
        %2206 = vmatprep.subr.bf16.mxu0 0
        %2207 = vmatpush1.bf16.msra.mxu0 0
        %2208 = vmatprep.subr.bf16.mxu0 0
        %2209 = vmatpush1.bf16.msra.mxu0 0
        %2210 = vmatprep.subr.bf16.mxu0 0
        %2211 = vmatpush1.bf16.msra.mxu0 0
        %2212 = vmatprep.subr.bf16.mxu0 0
        %2213 = vmatpush1.bf16.msra.mxu0 0
        %2214 = vmatprep.subr.bf16.mxu0 0
        %2215 = vmatpush1.bf16.msra.mxu0 %v2198
        %2216 = vmatprep.subr.bf16.mxu0 0
        %2217 = vmatpush2.bf16.msra.mxu0 0
        %2218 = vmatprep.subr.bf16.mxu0 0
        %2219 = vmatpush2.bf16.msra.mxu0 0
        %2220 = vmatprep.subr.bf16.mxu0 0
        %2221 = vmatpush2.bf16.msra.mxu0 0
        %2222 = vmatprep.subr.bf16.mxu0 0
        %2223 = vmatpush2.bf16.msra.mxu0 0
        %2224 = vmatprep.subr.bf16.mxu0 0
        %2225 = vmatpush2.bf16.msra.mxu0 0
        %2226 = vmatprep.subr.bf16.mxu0 0
        %2227 = vmatpush2.bf16.msra.mxu0 0
        %2228 = vmatprep.subr.bf16.mxu0 0
        %2229 = vmatpush2.bf16.msra.mxu0 0
        %2230 = vmatprep.subr.bf16.mxu0 0
        %2231 = vmatpush2.bf16.msra.mxu0 0
        %2232 = vmatprep.mubr.bf16.mxu0 0
        %2233 = vmatmul.mubr.bf16.gmra.mxu0 %v2186
        %v2234 = vpop.f32.mrf.mxu0
        %v2235 = vadd.f32 0.0, %v2234
        %v2236 = vpop.f32.mrf.mxu0
        %v2237 = vpop.f32.mrf.mxu0
        %v2238 = vadd.f32 0.0, %v2237
        %v2239 = vpop.f32.mrf.mxu0
        %2240 = vmatprep.mubr.bf16.mxu0 0
        %2241 = vmatmul.mubr.bf16.gmra.mxu0 %v2189
        %v2242 = vpop.f32.mrf.mxu0
        %v2243 = vadd.f32 0.0, %v2242
        %v2244 = vpop.f32.mrf.mxu0
        %v2245 = vpop.f32.mrf.mxu0
        %v2246 = vadd.f32 0.0, %v2245
        %v2247 = vpop.f32.mrf.mxu0
        %2248 = vmatprep.mubr.bf16.mxu0 0
        %2249 = vmatmul.mubr.bf16.gmra.mxu0 %v2192
        %v2250 = vpop.f32.mrf.mxu0
        %v2251 = vadd.f32 0.0, %v2250
        %v2252 = vpop.f32.mrf.mxu0
        %v2253 = vpop.f32.mrf.mxu0
        %v2254 = vadd.f32 0.0, %v2253
        %v2255 = vpop.f32.mrf.mxu0
        %2256 = vmatprep.mubr.bf16.mxu0 0
        %2257 = vmatmul.mubr.bf16.gmra.mxu0 %v2195
        %v2258 = vpop.f32.mrf.mxu0
        %v2259 = vadd.f32 0.0, %v2258
        %v2260 = vpop.f32.mrf.mxu0
        %v2261 = vpop.f32.mrf.mxu0
        %v2262 = vadd.f32 0.0, %v2261
        %v2263 = vpop.f32.mrf.mxu0
        %2264 = vdwg.mxu0
        %v2265 = vld [vmem:[%s8] sm:$0x1]
        %v2267 = vlaneseq
        %v2268 = vshrl.u32 %v2267, 7
        %v2269 = vsub.s32 0, %v2268
        %v2270 = vrot.slane %v2265, %v2269
        %v2272 = vmul.f32 %v2235, %v2270
        %v2273 = vmul.f32 %v2238, %v2270
        %v2274 = vmul.f32 %v2243, %v2270
        %v2275 = vmul.f32 %v2246, %v2270
        %v2276 = vmul.f32 %v2251, %v2270
        %v2277 = vmul.f32 %v2254, %v2270
        %v2278 = vmul.f32 %v2259, %v2270
        %v2279 = vmul.f32 %v2262, %v2270
        %v2280 = vld [vmem:[%s9] sm:$0x1]
        %v2282 = vlaneseq
        %v2283 = vshrl.u32 %v2282, 7
        %v2284 = vsub.s32 0, %v2283
        %v2285 = vrot.slane %v2280, %v2284
        %v2287 = vadd.f32 %v2272, %v2285
        %v2288 = vadd.f32 %v2273, %v2285
        %v2289 = vadd.f32 %v2274, %v2285
        %v2290 = vadd.f32 %v2275, %v2285
        %v2291 = vadd.f32 %v2276, %v2285
        %v2292 = vadd.f32 %v2277, %v2285
        %v2293 = vadd.f32 %v2278, %v2285
        %v2294 = vadd.f32 %v2279, %v2285
        %v2295 = vadd.f32 %v2140, %v2287
        %v2296 = vadd.f32 %v2141, %v2288
        %v2297 = vadd.f32 %v2142, %v2289
        %v2298 = vadd.f32 %v2143, %v2290
        %v2299 = vadd.f32 %v2144, %v2291
        %v2300 = vadd.f32 %v2145, %v2292
        %v2301 = vadd.f32 %v2146, %v2293
        %v2302 = vadd.f32 %v2147, %v2294
        %v2303 = vmax.f32 %v2295, 0.0
        %v2304 = vmax.f32 %v2296, 0.0
        %v2305 = vmax.f32 %v2297, 0.0
        %v2306 = vmax.f32 %v2298, 0.0
        %v2307 = vmax.f32 %v2299, 0.0
        %v2308 = vmax.f32 %v2300, 0.0
        %v2309 = vmax.f32 %v2301, 0.0
        %v2310 = vmax.f32 %v2302, 0.0
        %2311 = vst [vmem:[%s352] sm:$0xff] %v2303
        %2312 = vst [vmem:[%s352 + $0x8] sm:$0xff] %v2304
        %2313 = vst [vmem:[%s352 + $0x10] sm:$0xff] %v2305
        %2314 = vst [vmem:[%s352 + $0x18] sm:$0xff] %v2306
        %2315 = vst [vmem:[%s352 + $0x20] sm:$0xff] %v2307
        %2316 = vst [vmem:[%s352 + $0x28] sm:$0xff] %v2308
        %2317 = vst [vmem:[%s352 + $0x30] sm:$0xff] %v2309
        %2318 = vst [vmem:[%s352 + $0x38] sm:$0xff] %v2310
        %s2319 = sand.u32 %s247, 1
        %s2320 = scalar_lea.sflag [#allocation4], %s2319
        %s2321 = sand.u32 %s247, 1
        %s2322 = smul.addr %s2321, 64
        %s2323 = scalar_lea.vmem [#allocation3], %s2322
        // Predicated region
        $region61: #{tpu_custom_call.1} parent=59 // pred_check
          %p2324 = pneg %p257
        $region62: #{tpu_custom_call.1} parent=59 // pred_check_branch
          %2326 = sbr.rel (%p2324) target = $region64
        $region63: #{tpu_custom_call.1} parent=59 // pred_region
          %s2328 = ssub.s32 1024, 1024
          %2329 = vsyncadd %s2320, %s2328
          %s2330 = smul.addr %s24, 8
          %s2331 = smul.addr %s2330, 128
          %s2332 = scalar_lea.hbm %s10, %s2331
          %s2333 = sshll.u32 %s2323, 4
          %s2334 = int_to_ptr.vmem [resolvable:$true] %s2333
          %2339 = dma.vmem_to_hbm [thread:$0]  %s2334, 1024, %s2332, %s2320, 128, 128, 8
        $region64: #{tpu_custom_call.1} parent=59 // pred_fallthru
          _
      $region60: #{tpu_custom_call.1} parent=5 // pred_fallthru
        _
      %p2340 = scmp.le.s32.totalorder 2, %s19
      // Predicated region
      $region65: #{tpu_custom_call.1} parent=5 // pred_check
        %p2341 = pneg %p2340
      $region66: #{tpu_custom_call.1} parent=5 // pred_check_branch
        %2343 = sbr.rel (%p2341) target = $region68
      $region67: #{tpu_custom_call.1} parent=5 // pred_region
        %s2344 = ssub.s32 %s19, 2
        // Predicated region
        $region69: #{tpu_custom_call.1} parent=67 // pred_check
          %p2345 = pneg %p263
        $region70: #{tpu_custom_call.1} parent=67 // pred_check_branch
          %2347 = sbr.rel (%p2345) target = $region72
        $region71: #{tpu_custom_call.1} parent=67 // pred_region
          %s2348 = sand.u32 %s248, 1
          %s2349 = scalar_lea.sflag [#allocation4], %s2348
          %s2350 = sand.u32 %s248, 1
          %s2351 = smul.addr %s2350, 64
          %s2352 = scalar_lea.vmem [#allocation3], %s2351
          %2353 = dma.done %s2349, 1024
        $region72: #{tpu_custom_call.1} parent=67 // pred_fallthru
          _
      $region68: #{tpu_custom_call.1} parent=5 // pred_fallthru
        _
    $region6: #{tpu_custom_call.1} parent=1 // loop_footer
      %s23 = sadd.s32 1, %s19
    $region7: #{tpu_custom_call.1} parent=1 // loop_footer_branch
      %18 = sbr.rel target = $region3
    $region8: #{tpu_custom_call.1} parent=1 // loop_exit
      _
    %2354 = vsyncpa [#allocation4], 1
    %s2355 = scalar_lea.sflag [#allocation4], 1
    %2356 = vsyncpa %s2355, 1

</llo_original>
